<compile_context>
chip_gen: v5e
topology: v5e:2x2
jax: 0.10.0
libtpu: 0.0.40
codegen_flags: <defaults>
</compile_context>

<pallas_src>
import jax
import jax.numpy as jnp
from jax.experimental import pallas as pl
from jax.experimental.pallas import tpu as pltpu


# ---------------------------------------------------------------------------
# Kernel 1: per-point MLP (conv1-3 + folded BN + ReLU) + running max over
# point tiles.  grid = (B, N // TILE_N).
# ---------------------------------------------------------------------------
def conv_pool_kernel(x_ref,
                     w1_ref, b1_ref,
                     w2_ref, b2_ref,
                     w3_ref, b3_ref,
                     pooled_ref):
    n = pl.program_id(1)

    @pl.when(n == 0)
    def _():
        pooled_ref[...] = jnp.full_like(pooled_ref, -jnp.inf)

    # (TILE_N, k) block of points; bf16 into the MXU, fp32 accumulation,
    # bias + ReLU kept in fp32 (v5e-safe).
    x = x_ref[0].astype(jnp.bfloat16)

    h = jnp.dot(x, w1_ref[...], preferred_element_type=jnp.float32) + b1_ref[...]
    h = jnp.maximum(h, 0.0)
    h = jnp.dot(h.astype(jnp.bfloat16), w2_ref[...],
                preferred_element_type=jnp.float32) + b2_ref[...]
    h = jnp.maximum(h, 0.0)
    h = jnp.dot(h.astype(jnp.bfloat16), w3_ref[...],
                preferred_element_type=jnp.float32) + b3_ref[...]
    h = jnp.maximum(h, 0.0)                                   # (TILE_N, 1024)

    tile_max = jnp.max(h, axis=0, keepdims=True)              # (1, 1024)
    pooled_ref[...] = jnp.maximum(pooled_ref[...], tile_max[None])


# ---------------------------------------------------------------------------
# Kernel 2: fc1/fc2/fc3 (BN folded, eye folded into the fc3 bias) batched over
# the whole batch.  Lane-dense (B, k*k) output; reshape happens in the wrapper.
# ---------------------------------------------------------------------------
def fc_kernel(g_ref, w4_ref, b4_ref, w5_ref, b5_ref, w6_ref, b6_ref, out_ref):
    g = g_ref[...].astype(jnp.bfloat16)                       # (B, 1024)
    f = jnp.dot(g, w4_ref[...], preferred_element_type=jnp.float32) + b4_ref[...]
    f = jnp.maximum(f, 0.0)
    f = jnp.dot(f.astype(jnp.bfloat16), w5_ref[...],
                preferred_element_type=jnp.float32) + b5_ref[...]
    f = jnp.maximum(f, 0.0)
    out_ref[...] = jnp.dot(f.astype(jnp.bfloat16), w6_ref[...],
                           preferred_element_type=jnp.float32) + b6_ref[...]


def stnkd_forward(x_bnk, params, *, tile_n=128):
    """x_bnk: (B, N, k) float32.  Returns (B, k, k) float32."""
    B, N, k = x_bnk.shape
    (w1, b1), (w2, b2), (w3, b3), (w4, b4), (w5, b5), (w6, b6) = params

    tile_n = min(tile_n, N)
    if N % tile_n != 0:
        raise ValueError(f"N={N} must be a multiple of tile_n={tile_n}")
    num_n = N // tile_n

    full = lambda arr: pl.BlockSpec(arr.shape, lambda b, n: (0,) * arr.ndim)

    conv_flops = 2 * B * N * (k * 64 + 64 * 128 + 128 * 1024)
    conv_bytes = (x_bnk.size * 4
                  + (k * 64 + 64 * 128 + 128 * 1024) * 2
                  + (64 + 128 + 1024) * 4
                  + B * 1024 * 4)

    pooled = pl.pallas_call(
        conv_pool_kernel,
        out_shape=jax.ShapeDtypeStruct((B, 1, 1024), jnp.float32),
        grid_spec=pltpu.PrefetchScalarGridSpec(
            num_scalar_prefetch=0,
            grid=(B, num_n),
            in_specs=[
                pl.BlockSpec((1, tile_n, k), lambda b, n: (b, n, 0)),
                full(w1), full(b1),
                full(w2), full(b2),
                full(w3), full(b3),
            ],
            out_specs=pl.BlockSpec((1, 1, 1024), lambda b, n: (b, 0, 0)),
        ),
        compiler_params=pltpu.CompilerParams(
            dimension_semantics=("parallel", "arbitrary")),
        cost_estimate=pl.CostEstimate(flops=conv_flops, transcendentals=0,
                                      bytes_accessed=conv_bytes),
    )(x_bnk, w1, b1, w2, b2, w3, b3)

    g = pooled.reshape(B, 1024)

    # Fold the identity-matrix add of the reference forward into the fc3 bias
    # (one tiny (1, k*k) add at trace time; no extra pass over the output).
    b6_eff = b6 + jnp.eye(k, dtype=jnp.float32).reshape(1, k * k)

    fc_flops = 2 * B * (1024 * 512 + 512 * 256 + 256 * k * k)
    fc_bytes = (B * 1024 * 4
                + (1024 * 512 + 512 * 256 + 256 * k * k) * 2
                + (512 + 256 + k * k) * 4
                + B * k * k * 4)

    # Grid-less call: every operand is a full VMEM block; (B, k*k) output is
    # lane-dense (unmasked stores).
    flat = pl.pallas_call(
        fc_kernel,
        out_shape=jax.ShapeDtypeStruct((B, k * k), jnp.float32),
        cost_estimate=pl.CostEstimate(flops=fc_flops, transcendentals=0,
                                      bytes_accessed=fc_bytes),
    )(g, w4, b4, w5, b5, w6, b6_eff)

    return flat.reshape(B, k, k)


# ---------------------------------------------------------------------------
# Pure-JAX reference (same folded / bf16 weights) for a sanity check.
# ---------------------------------------------------------------------------
def stnkd_reference(x_bnk, params):
    (w1, b1), (w2, b2), (w3, b3), (w4, b4), (w5, b5), (w6, b6) = params
    B, N, k = x_bnk.shape

    def mm(a, w):
        return jnp.dot(a.astype(jnp.bfloat16), w,
                       preferred_element_type=jnp.float32)

    h = jnp.maximum(mm(x_bnk, w1) + b1, 0.0)
    h = jnp.maximum(mm(h, w2) + b2, 0.0)
    h = jnp.maximum(mm(h, w3) + b3, 0.0)          # (B, N, 1024)
    g = jnp.max(h, axis=1)                        # (B, 1024)
    f = jnp.maximum(mm(g, w4) + b4, 0.0)
    f = jnp.maximum(mm(f, w5) + b5, 0.0)
    f = mm(f, w6) + b6
    f = f + jnp.eye(k, dtype=jnp.float32).reshape(1, k * k)
    return f.reshape(B, k, k)


# ---------------------------------------------------------------------------
# Parameter construction (PyTorch default init) with BN folding.
# ---------------------------------------------------------------------------
def _init_linear(key, out_dim, in_dim):
    kw, kb = jax.random.split(key)
    bound = 1.0 / (in_dim ** 0.5)
    w = jax.random.uniform(kw, (out_dim, in_dim), jnp.float32, -bound, bound)
    b = jax.random.uniform(kb, (out_dim,), jnp.float32, -bound, bound)
    return w, b


def _fold_bn(w, b, gamma, beta, mean, var, eps=1e-5):
    scale = gamma / jnp.sqrt(var + eps)
    w_f = w * scale[:, None]
    b_f = b * scale + beta - mean * scale
    return w_f, b_f


def make_params(key, k):
    keys = jax.random.split(key, 6)
    dims = [(64, k), (128, 64), (1024, 128), (512, 1024), (256, 512), (k * k, 256)]
    raw = [_init_linear(kk, o, i) for kk, (o, i) in zip(keys, dims)]

    # BatchNorm (fresh module, eval mode): gamma=1, beta=0, mean=0, var=1.
    def bn_default(c):
        return (jnp.ones((c,), jnp.float32), jnp.zeros((c,), jnp.float32),
                jnp.zeros((c,), jnp.float32), jnp.ones((c,), jnp.float32))

    bn_dims = [64, 128, 1024, 512, 256]
    folded = []
    for i, (w, b) in enumerate(raw):
        if i < 5:  # conv1-3, fc1-2 have BN; fc3 does not
            g, bt, m, v = bn_default(bn_dims[i])
            w, b = _fold_bn(w, b, g, bt, m, v)
        # transpose to (in, out) and cast to bf16 (MXU-native); biases fp32 (1, out).
        folded.append((jnp.asarray(w.T, dtype=jnp.bfloat16),
                       b.reshape(1, -1).astype(jnp.float32)))
    return folded


if __name__ == "__main__":
    key = jax.random.PRNGKey(0)
    k = 16       # STNkd(k=16)
    B = 2        # batch (keeps both v7x TensorCores busy via the parallel axis)
    N = 256      # number of points (multiple of TILE_N=128)

    k_x, k_p = jax.random.split(key)
    # PyTorch input would be (B, k, N); kernel layout is (B, N, k).
    x_torch_layout = jax.random.normal(k_x, (B, k, N), jnp.float32)
    x_bnk = jnp.transpose(x_torch_layout, (0, 2, 1))

    params = make_params(k_p, k)

    out = stnkd_forward(x_bnk, params, tile_n=128)
    out = jax.block_until_ready(out)
    assert out.shape == (B, k, k)

    ref = jax.block_until_ready(stnkd_reference(x_bnk, params))
    assert jnp.allclose(out, ref, rtol=5e-2, atol=5e-2), "mismatch vs reference"

    print("KERNEL_OK")
</pallas_src>

<mosaic_0001>
module attributes {stable_mosaic.version = 11 : i64} {
  func.func @conv_pool_kernel(%arg0: i32, %arg1: i32, %arg2: memref<1x128x16xf32, #tpu.memory_space<vmem>>, %arg3: memref<16x64xbf16, #tpu.memory_space<vmem>>, %arg4: memref<1x64xf32, #tpu.memory_space<vmem>>, %arg5: memref<64x128xbf16, #tpu.memory_space<vmem>>, %arg6: memref<1x128xf32, #tpu.memory_space<vmem>>, %arg7: memref<128x1024xbf16, #tpu.memory_space<vmem>>, %arg8: memref<1x1024xf32, #tpu.memory_space<vmem>>, %arg9: memref<1x1x1024xf32, #tpu.memory_space<vmem>>) attributes {dimension_semantics = [#tpu.dimension_semantics<parallel>, #tpu.dimension_semantics<arbitrary>], iteration_bounds = array<i64: 2, 2>, scalar_prefetch = 0 : i64, scratch_operands = 0 : i64, tpu.core_type = #tpu.core_type<tc>, window_params = [{transform_indices = @transform_0, window_bounds = array<i64: 1, 128, 16>}, {pipeline_mode = #tpu.pipeline_mode<synchronous>, transform_indices = @transform_1, window_bounds = array<i64: 16, 64>}, {pipeline_mode = #tpu.pipeline_mode<synchronous>, transform_indices = @transform_2, window_bounds = array<i64: 1, 64>}, {pipeline_mode = #tpu.pipeline_mode<synchronous>, transform_indices = @transform_3, window_bounds = array<i64: 64, 128>}, {pipeline_mode = #tpu.pipeline_mode<synchronous>, transform_indices = @transform_4, window_bounds = array<i64: 1, 128>}, {pipeline_mode = #tpu.pipeline_mode<synchronous>, transform_indices = @transform_5, window_bounds = array<i64: 128, 1024>}, {pipeline_mode = #tpu.pipeline_mode<synchronous>, transform_indices = @transform_6, window_bounds = array<i64: 1, 1024>}, {transform_indices = @transform_7, window_bounds = array<i64: 1, 1, 1024>}]} {
    %c0_i32 = arith.constant 0 : i32
    %0 = arith.cmpi eq, %arg1, %c0_i32 : i32
    %1 = arith.extui %0 : i1 to i32
    %c0_i32_0 = arith.constant 0 : i32
    %2 = arith.cmpi ne, %1, %c0_i32_0 : i32
    scf.if %2 {
      %cst_27 = arith.constant 0xFF800000 : f32
      %35 = vector.broadcast %cst_27 : f32 to vector<1x1x1024xf32>
      %c0_28 = arith.constant 0 : index
      %c0_29 = arith.constant 0 : index
      %c0_30 = arith.constant 0 : index
      %36 = vector.load %arg9[%c0_28, %c0_29, %c0_30] : memref<1x1x1024xf32, #tpu.memory_space<vmem>>, vector<1x1x1024xf32>
      tpu.vector_store %arg9[%c0_28, %c0_29, %c0_30], %35 {strides = array<i32>} : memref<1x1x1024xf32, #tpu.memory_space<vmem>>, vector<1x1x1024xf32>,
    } else {
    }
    %c0 = arith.constant 0 : index
    %c0_1 = arith.constant 0 : index
    %c0_2 = arith.constant 0 : index
    %3 = vector.load %arg2[%c0, %c0_1, %c0_2] : memref<1x128x16xf32, #tpu.memory_space<vmem>>, vector<1x128x16xf32>
    %4 = vector.shape_cast %3 : vector<1x128x16xf32> to vector<128x16xf32>
    %5 = arith.truncf %4 : vector<128x16xf32> to vector<128x16xbf16>
    %c0_3 = arith.constant 0 : index
    %c0_4 = arith.constant 0 : index
    %6 = vector.load %arg3[%c0_3, %c0_4] : memref<16x64xbf16, #tpu.memory_space<vmem>>, vector<16x64xbf16>
    %cst = arith.constant dense<0.000000e+00> : vector<128x64xf32>
    %7 = tpu.matmul %5, %6, %cst {dimension_numbers = #tpu.dot_dimension_numbers<[1], [0], [0], [1], [0, 0, 1, 1], [], []>} : vector<128x16xbf16>, vector<16x64xbf16>, vector<128x64xf32> -> vector<128x64xf32>
    %c0_5 = arith.constant 0 : index
    %c0_6 = arith.constant 0 : index
    %8 = vector.load %arg4[%c0_5, %c0_6] : memref<1x64xf32, #tpu.memory_space<vmem>>, vector<1x64xf32>
    %9 = vector.broadcast %8 : vector<1x64xf32> to vector<128x64xf32>
    %10 = arith.addf %7, %9 : vector<128x64xf32>
    %cst_7 = arith.constant 0.000000e+00 : f32
    %11 = vector.broadcast %cst_7 : f32 to vector<128x64xf32>
    %12 = arith.maximumf %10, %11 : vector<128x64xf32>
    %13 = arith.truncf %12 : vector<128x64xf32> to vector<128x64xbf16>
    %c0_8 = arith.constant 0 : index
    %c0_9 = arith.constant 0 : index
    %14 = vector.load %arg5[%c0_8, %c0_9] : memref<64x128xbf16, #tpu.memory_space<vmem>>, vector<64x128xbf16>
    %cst_10 = arith.constant dense<0.000000e+00> : vector<128x128xf32>
    %15 = tpu.matmul %13, %14, %cst_10 {dimension_numbers = #tpu.dot_dimension_numbers<[1], [0], [0], [1], [0, 0, 1, 1], [], []>} : vector<128x64xbf16>, vector<64x128xbf16>, vector<128x128xf32> -> vector<128x128xf32>
    %c0_11 = arith.constant 0 : index
    %c0_12 = arith.constant 0 : index
    %16 = vector.load %arg6[%c0_11, %c0_12] : memref<1x128xf32, #tpu.memory_space<vmem>>, vector<1x128xf32>
    %17 = vector.broadcast %16 : vector<1x128xf32> to vector<128x128xf32>
    %18 = arith.addf %15, %17 : vector<128x128xf32>
    %cst_13 = arith.constant 0.000000e+00 : f32
    %19 = vector.broadcast %cst_13 : f32 to vector<128x128xf32>
    %20 = arith.maximumf %18, %19 : vector<128x128xf32>
    %21 = arith.truncf %20 : vector<128x128xf32> to vector<128x128xbf16>
    %c0_14 = arith.constant 0 : index
    %c0_15 = arith.constant 0 : index
    %22 = vector.load %arg7[%c0_14, %c0_15] : memref<128x1024xbf16, #tpu.memory_space<vmem>>, vector<128x1024xbf16>
    %cst_16 = arith.constant dense<0.000000e+00> : vector<128x1024xf32>
    %23 = tpu.matmul %21, %22, %cst_16 {dimension_numbers = #tpu.dot_dimension_numbers<[1], [0], [0], [1], [0, 0, 1, 1], [], []>} : vector<128x128xbf16>, vector<128x1024xbf16>, vector<128x1024xf32> -> vector<128x1024xf32>
    %c0_17 = arith.constant 0 : index
    %c0_18 = arith.constant 0 : index
    %24 = vector.load %arg8[%c0_17, %c0_18] : memref<1x1024xf32, #tpu.memory_space<vmem>>, vector<1x1024xf32>
    %25 = vector.broadcast %24 : vector<1x1024xf32> to vector<128x1024xf32>
    %26 = arith.addf %23, %25 : vector<128x1024xf32>
    %cst_19 = arith.constant 0.000000e+00 : f32
    %27 = vector.broadcast %cst_19 : f32 to vector<128x1024xf32>
    %28 = arith.maximumf %26, %27 : vector<128x1024xf32>
    %cst_20 = arith.constant dense<0xFF800000> : vector<1024xf32>
    %29 = vector.multi_reduction <maximumf>, %28, %cst_20 [0] : vector<128x1024xf32> to vector<1024xf32>
    %30 = vector.shape_cast %29 : vector<1024xf32> to vector<1x1024xf32>
    %c0_21 = arith.constant 0 : index
    %c0_22 = arith.constant 0 : index
    %c0_23 = arith.constant 0 : index
    %31 = vector.load %arg9[%c0_21, %c0_22, %c0_23] : memref<1x1x1024xf32, #tpu.memory_space<vmem>>, vector<1x1x1024xf32>
    %32 = vector.shape_cast %30 : vector<1x1024xf32> to vector<1x1x1024xf32>
    %33 = arith.maximumf %31, %32 : vector<1x1x1024xf32>
    %c0_24 = arith.constant 0 : index
    %c0_25 = arith.constant 0 : index
    %c0_26 = arith.constant 0 : index
    %34 = vector.load %arg9[%c0_24, %c0_25, %c0_26] : memref<1x1x1024xf32, #tpu.memory_space<vmem>>, vector<1x1x1024xf32>
    tpu.vector_store %arg9[%c0_24, %c0_25, %c0_26], %33 {strides = array<i32>} : memref<1x1x1024xf32, #tpu.memory_space<vmem>>, vector<1x1x1024xf32>,
    return
  }
  func.func @transform_0(%arg0: i32, %arg1: i32) -> (i32, i32, i32) {
    %c0_i32 = arith.constant 0 : i32
    %c0_i32_0 = arith.constant 0 : i32
    return %arg0, %arg1, %c0_i32 : i32, i32, i32
  }
  func.func @transform_1(%arg0: i32, %arg1: i32) -> (i32, i32) {
    %c0_i32 = arith.constant 0 : i32
    %c0_i32_0 = arith.constant 0 : i32
    %c0_i32_1 = arith.constant 0 : i32
    return %c0_i32, %c0_i32_0 : i32, i32
  }
  func.func @transform_2(%arg0: i32, %arg1: i32) -> (i32, i32) {
    %c0_i32 = arith.constant 0 : i32
    %c0_i32_0 = arith.constant 0 : i32
    %c0_i32_1 = arith.constant 0 : i32
    return %c0_i32, %c0_i32_0 : i32, i32
  }
  func.func @transform_3(%arg0: i32, %arg1: i32) -> (i32, i32) {
    %c0_i32 = arith.constant 0 : i32
    %c0_i32_0 = arith.constant 0 : i32
    %c0_i32_1 = arith.constant 0 : i32
    return %c0_i32, %c0_i32_0 : i32, i32
  }
  func.func @transform_4(%arg0: i32, %arg1: i32) -> (i32, i32) {
    %c0_i32 = arith.constant 0 : i32
    %c0_i32_0 = arith.constant 0 : i32
    %c0_i32_1 = arith.constant 0 : i32
    return %c0_i32, %c0_i32_0 : i32, i32
  }
  func.func @transform_5(%arg0: i32, %arg1: i32) -> (i32, i32) {
    %c0_i32 = arith.constant 0 : i32
    %c0_i32_0 = arith.constant 0 : i32
    %c0_i32_1 = arith.constant 0 : i32
    return %c0_i32, %c0_i32_0 : i32, i32
  }
  func.func @transform_6(%arg0: i32, %arg1: i32) -> (i32, i32) {
    %c0_i32 = arith.constant 0 : i32
    %c0_i32_0 = arith.constant 0 : i32
    %c0_i32_1 = arith.constant 0 : i32
    return %c0_i32, %c0_i32_0 : i32, i32
  }
  func.func @transform_7(%arg0: i32, %arg1: i32) -> (i32, i32, i32) {
    %c0_i32 = arith.constant 0 : i32
    %c0_i32_0 = arith.constant 0 : i32
    %c0_i32_1 = arith.constant 0 : i32
    return %arg0, %c0_i32, %c0_i32_0 : i32, i32, i32
  }
}

</mosaic_0001>

<llo_original>
// kernel: tpu_custom_call.1
$region0: #{tpu_custom_call.1}
  #allocation0 [shape = 'u32[]', space=smem, size = 0x4, offset = 0x4, fixed_abs, tag = 'smem constant byte address 0x4 - core index']
  #allocation1 [shape = 'u32[72,128]{1,0:T(1,128)}', space=vmem, size = 0x9000, scoped, tag = 'internal scratch']
  %s0 = inlined_call_operand.vmem [shape: f32[2,256,16], index: 0, kind: input, shape index: {}]
  %s1 = inlined_call_operand.vmem [shape: bf16[16,64], index: 1, kind: input, shape index: {}]
  %s2 = inlined_call_operand.vmem [shape: f32[1,64], index: 2, kind: input, shape index: {}]
  %s3 = inlined_call_operand.vmem [shape: bf16[64,128], index: 3, kind: input, shape index: {}]
  %s4 = inlined_call_operand.vmem [shape: f32[1,128], index: 4, kind: input, shape index: {}]
  %s5 = inlined_call_operand.vmem [shape: bf16[128,1024], index: 5, kind: input, shape index: {}]
  %s6 = inlined_call_operand.vmem [shape: f32[1,1024], index: 6, kind: input, shape index: {}]
  %s7 = inlined_call_operand.hbm [shape: f32[2,1,1024], index: 7, kind: output, shape index: {}]
  %s8 = sld [smem:[#allocation0]]
  $region65: #{tpu_custom_call.1} parent=0
    _
  %s10 = ssub.s32 1, %s8
  %s11 = scalar_select 0, %s10, %s8
  $region1: #{tpu_custom_call.1} parent=0
    #allocation2 [shape = 'u8[8192]{0}', space=vmem, size = 0x2000, scoped, tag = 'output window, operand 0']
    #allocation3 [shape = 's32[2]{0}', space=sflag, size = 0x8, scoped, tag = 'scoped memory for tpu_custom_call.1']
    %12 = vsyncpa [#allocation3], 0
    %s13 = scalar_lea.sflag [#allocation3], 1
    %14 = vsyncpa %s13, 0
    loop: start=0, step=1, limit=6
    $region2: #{tpu_custom_call.1} parent=1 // loop_pre_header
      _
    $region3: #{tpu_custom_call.1} parent=1 // loop_header
      %s16 = sphi 0, %s20
      %p17 = scmp.ge.s32.totalorder %s16, 6
      %s23 = sphi 0, %s35
      %s24 = sphi 0, %s31
      %s25 = sphi 0, %s23
      %s26 = sphi 0, %s24
      %s27 = sphi 0, %s25
      %s28 = sphi 0, %s26
      %s40 = sphi 0, %s42
      %s43 = sphi 0, %s40
      %s44 = sphi 0, %s43
      %s60 = sphi 0, %s44
      %s64 = sphi 0, %s64
      %s66 = sphi 0, %s64
      %s67 = sphi 0, %s66
      %s81 = sphi 0, %s67
      %s85 = sphi 0, %s85
      %s87 = sphi 0, %s85
      %s88 = sphi 0, %s87
      %s102 = sphi 0, %s88
      %s106 = sphi 0, %s106
      %s108 = sphi 0, %s106
      %s109 = sphi 0, %s108
      %s123 = sphi 0, %s109
      %s127 = sphi 0, %s127
      %s129 = sphi 0, %s127
      %s130 = sphi 0, %s129
      %s144 = sphi 0, %s130
      %s148 = sphi 0, %s148
      %s150 = sphi 0, %s148
      %s151 = sphi 0, %s150
      %s165 = sphi 0, %s151
      %s169 = sphi 0, %s169
      %s171 = sphi 0, %s169
      %s172 = sphi 0, %s171
      %s186 = sphi 0, %s172
      %s192 = sphi 0, %s194
      %s195 = sphi 0, %s192
      %s196 = sphi 0, %s195
      %s212 = sphi 0, %s196
    $region4: #{tpu_custom_call.1} parent=1 // loop_header_branch
      %19 = sbr.rel (%p17) target = $region8
    $region5: #{tpu_custom_call.1} parent=1 // loop_body
      %s21 = ssub.s32 %s16, 1
      %s22 = ssub.s32 %s16, 2
      %s29 = sadd.s32 1, %s24
      %p30 = scmp.ge.s32.totalorder %s29, 2
      %s31 = scalar_select %p30, 0, %s29
      %s32 = sadd.s32 1, %s23
      %s33 = scalar_select %p30, %s32, %s23
      %p34 = scmp.ge.s32.totalorder %s33, 2
      %s35 = scalar_select %p34, 0, %s33
      %s36 = ssub.s32 %s23, %s35
      %s37 = ssub.s32 %s24, %s31
      %s38 = sor.u32 %s36, %s37
      %p39 = scmp.eq.s32.totalorder %s38, 0
      %s41 = sadd.s32 %s40, 1
      %s42 = scalar_select %p39, %s40, %s41
      %p45 = pneg %p39
      %p46 = scmp.eq.s32.totalorder %s16, 3
      %p47 = por %p45, %p46
      %p48 = scmp.ne.s32.totalorder %s40, %s43
      %p49 = scmp.eq.s32.totalorder %s16, 0
      %p50 = por %p48, %p49
      %p51 = scmp.ne.s32.totalorder %s40, %s43
      %p52 = scmp.eq.s32.totalorder %s21, 3
      %p53 = por %p51, %p52
      %p54 = scmp.ne.s32.totalorder %s43, %s44
      %p55 = scmp.eq.s32.totalorder %s21, 0
      %p56 = por %p54, %p55
      %p57 = scmp.ne.s32.totalorder %s43, %s44
      %p58 = scmp.eq.s32.totalorder %s22, 3
      %p59 = por %p57, %p58
      %p61 = scmp.ne.s32.totalorder %s44, %s60
      %p62 = scmp.eq.s32.totalorder %s22, 0
      %p63 = por %p61, %p62
      %s65 = sadd.s32 %s64, 1
      %p68 = scmp.eq.s32.totalorder %s16, 3
      %p69 = scmp.ne.s32.totalorder %s64, %s66
      %p70 = scmp.eq.s32.totalorder %s16, 0
      %p71 = por %p69, %p70
      %p72 = scmp.ne.s32.totalorder %s64, %s66
      %p73 = scmp.eq.s32.totalorder %s21, 3
      %p74 = por %p72, %p73
      %p75 = scmp.ne.s32.totalorder %s66, %s67
      %p76 = scmp.eq.s32.totalorder %s21, 0
      %p77 = por %p75, %p76
      %p78 = scmp.ne.s32.totalorder %s66, %s67
      %p79 = scmp.eq.s32.totalorder %s22, 3
      %p80 = por %p78, %p79
      %p82 = scmp.ne.s32.totalorder %s67, %s81
      %p83 = scmp.eq.s32.totalorder %s22, 0
      %p84 = por %p82, %p83
      %s86 = sadd.s32 %s85, 1
      %p89 = scmp.eq.s32.totalorder %s16, 3
      %p90 = scmp.ne.s32.totalorder %s85, %s87
      %p91 = scmp.eq.s32.totalorder %s16, 0
      %p92 = por %p90, %p91
      %p93 = scmp.ne.s32.totalorder %s85, %s87
      %p94 = scmp.eq.s32.totalorder %s21, 3
      %p95 = por %p93, %p94
      %p96 = scmp.ne.s32.totalorder %s87, %s88
      %p97 = scmp.eq.s32.totalorder %s21, 0
      %p98 = por %p96, %p97
      %p99 = scmp.ne.s32.totalorder %s87, %s88
      %p100 = scmp.eq.s32.totalorder %s22, 3
      %p101 = por %p99, %p100
      %p103 = scmp.ne.s32.totalorder %s88, %s102
      %p104 = scmp.eq.s32.totalorder %s22, 0
      %p105 = por %p103, %p104
      %s107 = sadd.s32 %s106, 1
      %p110 = scmp.eq.s32.totalorder %s16, 3
      %p111 = scmp.ne.s32.totalorder %s106, %s108
      %p112 = scmp.eq.s32.totalorder %s16, 0
      %p113 = por %p111, %p112
      %p114 = scmp.ne.s32.totalorder %s106, %s108
      %p115 = scmp.eq.s32.totalorder %s21, 3
      %p116 = por %p114, %p115
      %p117 = scmp.ne.s32.totalorder %s108, %s109
      %p118 = scmp.eq.s32.totalorder %s21, 0
      %p119 = por %p117, %p118
      %p120 = scmp.ne.s32.totalorder %s108, %s109
      %p121 = scmp.eq.s32.totalorder %s22, 3
      %p122 = por %p120, %p121
      %p124 = scmp.ne.s32.totalorder %s109, %s123
      %p125 = scmp.eq.s32.totalorder %s22, 0
      %p126 = por %p124, %p125
      %s128 = sadd.s32 %s127, 1
      %p131 = scmp.eq.s32.totalorder %s16, 3
      %p132 = scmp.ne.s32.totalorder %s127, %s129
      %p133 = scmp.eq.s32.totalorder %s16, 0
      %p134 = por %p132, %p133
      %p135 = scmp.ne.s32.totalorder %s127, %s129
      %p136 = scmp.eq.s32.totalorder %s21, 3
      %p137 = por %p135, %p136
      %p138 = scmp.ne.s32.totalorder %s129, %s130
      %p139 = scmp.eq.s32.totalorder %s21, 0
      %p140 = por %p138, %p139
      %p141 = scmp.ne.s32.totalorder %s129, %s130
      %p142 = scmp.eq.s32.totalorder %s22, 3
      %p143 = por %p141, %p142
      %p145 = scmp.ne.s32.totalorder %s130, %s144
      %p146 = scmp.eq.s32.totalorder %s22, 0
      %p147 = por %p145, %p146
      %s149 = sadd.s32 %s148, 1
      %p152 = scmp.eq.s32.totalorder %s16, 3
      %p153 = scmp.ne.s32.totalorder %s148, %s150
      %p154 = scmp.eq.s32.totalorder %s16, 0
      %p155 = por %p153, %p154
      %p156 = scmp.ne.s32.totalorder %s148, %s150
      %p157 = scmp.eq.s32.totalorder %s21, 3
      %p158 = por %p156, %p157
      %p159 = scmp.ne.s32.totalorder %s150, %s151
      %p160 = scmp.eq.s32.totalorder %s21, 0
      %p161 = por %p159, %p160
      %p162 = scmp.ne.s32.totalorder %s150, %s151
      %p163 = scmp.eq.s32.totalorder %s22, 3
      %p164 = por %p162, %p163
      %p166 = scmp.ne.s32.totalorder %s151, %s165
      %p167 = scmp.eq.s32.totalorder %s22, 0
      %p168 = por %p166, %p167
      %s170 = sadd.s32 %s169, 1
      %p173 = scmp.eq.s32.totalorder %s16, 3
      %p174 = scmp.ne.s32.totalorder %s169, %s171
      %p175 = scmp.eq.s32.totalorder %s16, 0
      %p176 = por %p174, %p175
      %p177 = scmp.ne.s32.totalorder %s169, %s171
      %p178 = scmp.eq.s32.totalorder %s21, 3
      %p179 = por %p177, %p178
      %p180 = scmp.ne.s32.totalorder %s171, %s172
      %p181 = scmp.eq.s32.totalorder %s21, 0
      %p182 = por %p180, %p181
      %p183 = scmp.ne.s32.totalorder %s171, %s172
      %p184 = scmp.eq.s32.totalorder %s22, 3
      %p185 = por %p183, %p184
      %p187 = scmp.ne.s32.totalorder %s172, %s186
      %p188 = scmp.eq.s32.totalorder %s22, 0
      %p189 = por %p187, %p188
      %s190 = ssub.s32 %s23, %s35
      %p191 = scmp.eq.s32.totalorder %s190, 0
      %s193 = sadd.s32 %s192, 1
      %s194 = scalar_select %p191, %s192, %s193
      %p197 = pneg %p191
      %p198 = scmp.eq.s32.totalorder %s16, 3
      %p199 = por %p197, %p198
      %p200 = scmp.ne.s32.totalorder %s192, %s195
      %p201 = scmp.eq.s32.totalorder %s16, 0
      %p202 = por %p200, %p201
      %p203 = scmp.ne.s32.totalorder %s192, %s195
      %p204 = scmp.eq.s32.totalorder %s21, 3
      %p205 = por %p203, %p204
      %p206 = scmp.ne.s32.totalorder %s195, %s196
      %p207 = scmp.eq.s32.totalorder %s21, 0
      %p208 = por %p206, %p207
      %p209 = scmp.ne.s32.totalorder %s195, %s196
      %p210 = scmp.eq.s32.totalorder %s22, 3
      %p211 = por %p209, %p210
      %p213 = scmp.ne.s32.totalorder %s196, %s212
      %p214 = scmp.eq.s32.totalorder %s22, 0
      %p215 = por %p213, %p214
      %p216 = scmp.le.s32.totalorder 1, %s16
      %p217 = scmp.lt.s32.totalorder %s16, 5
      %p218 = pnand %p216, %p217
      %p219 = pneg %p218
      // Predicated region
      $region9: #{tpu_custom_call.1} parent=5 // pred_check
        _
      $region10: #{tpu_custom_call.1} parent=5 // pred_check_branch
        %221 = sbr.rel (%p218) target = $region12
      $region11: #{tpu_custom_call.1} parent=5 // pred_region
        %s222 = ssub.s32 %s16, 1
        // Predicated region
        $region13: #{tpu_custom_call.1} parent=11 // pred_check
          %p223 = pneg %p77
        $region14: #{tpu_custom_call.1} parent=11 // pred_check_branch
          %225 = sbr.rel (%p223) target = $region16
        $region15: #{tpu_custom_call.1} parent=11 // pred_region
          _
        $region16: #{tpu_custom_call.1} parent=11 // pred_fallthru
          _
        // Predicated region
        $region17: #{tpu_custom_call.1} parent=11 // pred_check
          %p226 = pneg %p98
        $region18: #{tpu_custom_call.1} parent=11 // pred_check_branch
          %228 = sbr.rel (%p226) target = $region20
        $region19: #{tpu_custom_call.1} parent=11 // pred_region
          _
        $region20: #{tpu_custom_call.1} parent=11 // pred_fallthru
          _
        // Predicated region
        $region21: #{tpu_custom_call.1} parent=11 // pred_check
          %p229 = pneg %p119
        $region22: #{tpu_custom_call.1} parent=11 // pred_check_branch
          %231 = sbr.rel (%p229) target = $region24
        $region23: #{tpu_custom_call.1} parent=11 // pred_region
          _
        $region24: #{tpu_custom_call.1} parent=11 // pred_fallthru
          _
        // Predicated region
        $region25: #{tpu_custom_call.1} parent=11 // pred_check
          %p232 = pneg %p140
        $region26: #{tpu_custom_call.1} parent=11 // pred_check_branch
          %234 = sbr.rel (%p232) target = $region28
        $region27: #{tpu_custom_call.1} parent=11 // pred_region
          _
        $region28: #{tpu_custom_call.1} parent=11 // pred_fallthru
          _
        // Predicated region
        $region29: #{tpu_custom_call.1} parent=11 // pred_check
          %p235 = pneg %p161
        $region30: #{tpu_custom_call.1} parent=11 // pred_check_branch
          %237 = sbr.rel (%p235) target = $region32
        $region31: #{tpu_custom_call.1} parent=11 // pred_region
          _
        $region32: #{tpu_custom_call.1} parent=11 // pred_fallthru
          _
        // Predicated region
        $region33: #{tpu_custom_call.1} parent=11 // pred_check
          %p238 = pneg %p182
        $region34: #{tpu_custom_call.1} parent=11 // pred_check_branch
          %240 = sbr.rel (%p238) target = $region36
        $region35: #{tpu_custom_call.1} parent=11 // pred_region
          _
        $region36: #{tpu_custom_call.1} parent=11 // pred_fallthru
          _
      $region12: #{tpu_custom_call.1} parent=5 // pred_fallthru
        _
      %p241 = scmp.lt.s32.totalorder %s16, 4
      // Predicated region
      $region37: #{tpu_custom_call.1} parent=5 // pred_check
        %p242 = pneg %p241
      $region38: #{tpu_custom_call.1} parent=5 // pred_check_branch
        %244 = sbr.rel (%p242) target = $region40
      $region39: #{tpu_custom_call.1} parent=5 // pred_region
        // Predicated region
        $region41: #{tpu_custom_call.1} parent=39 // pred_check
          %p245 = pneg %p50
        $region42: #{tpu_custom_call.1} parent=39 // pred_check_branch
          %247 = sbr.rel (%p245) target = $region44
        $region43: #{tpu_custom_call.1} parent=39 // pred_region
          %s248 = smul.u32 16, %s24
          %p249 = scmp.lt.s32.totalorder %s23, 1
          %s250 = scalar_select %p249, %s23, 1
          %p251 = scmp.lt.s32.totalorder %s248, 31
          %s252 = scalar_select %p251, %s248, 31
          %s253 = smul.addr %s250, 32
          %s254 = sadd.s32 %s252, %s253
          %s255 = smul.addr %s254, 8
          %s256 = scalar_lea.vmem %s0, %s255
          %s257 = smul.u32 16, %s24
        $region44: #{tpu_custom_call.1} parent=39 // pred_fallthru
          _
      $region40: #{tpu_custom_call.1} parent=5 // pred_fallthru
        _
      %p258 = scmp.le.s32.totalorder 1, %s16
      %p259 = scmp.lt.s32.totalorder %s16, 5
      %p260 = pnand %p258, %p259
      %p261 = pneg %p260
      // Predicated region
      $region45: #{tpu_custom_call.1} parent=5 // pred_check
        _
      $region46: #{tpu_custom_call.1} parent=5 // pred_check_branch
        %263 = sbr.rel (%p260) target = $region48
      $region47: #{tpu_custom_call.1} parent=5 // pred_region
        %s264 = ssub.s32 %s16, 1
        %s265 = smul.u32 16, %s26
        %p266 = scmp.lt.s32.totalorder %s25, 1
        %s267 = scalar_select %p266, %s25, 1
        %p268 = scmp.lt.s32.totalorder %s265, 31
        %s269 = scalar_select %p268, %s265, 31
        %s270 = smul.addr %s267, 32
        %s271 = sadd.s32 %s269, %s270
        %s272 = smul.addr %s271, 8
        %s273 = scalar_lea.vmem %s0, %s272
        %p274 = pneg %p56
        %p275 = pneg %p53
        %p276 = pneg %p77
        %p277 = pneg %p74
        %p278 = pneg %p98
        %p279 = pneg %p95
        %p280 = pneg %p119
        %p281 = pneg %p116
        %p282 = pneg %p140
        %p283 = pneg %p137
        %p284 = pneg %p161
        %p285 = pneg %p158
        %p286 = pneg %p182
        %p287 = pneg %p179
        %p288 = pneg %p208
        %p289 = pneg %p205
        %s290 = sand.u32 %s195, 1
        %s291 = scalar_lea.sflag [#allocation3], %s290
        %s292 = sand.u32 %s195, 1
        %s293 = smul.addr %s292, 8
        %s294 = scalar_lea.vmem [#allocation2], %s293
        %s295 = smul.u32 16, %s26
        %p296 = scmp.lt.s32.totalorder %s25, 1
        %s297 = scalar_select %p296, %s25, 1
        %p298 = scmp.lt.s32.totalorder %s295, 31
        %s299 = scalar_select %p298, %s295, 31
        %s300 = smul.addr %s297, 32
        %s301 = sadd.s32 %s299, %s300
        %s302 = smul.addr %s301, 8
        %s303 = scalar_lea.vmem %s0, %s302
        %s304 = smul.u32 16, %s26
        %p306 = scmp.eq.s32.totalorder %s26, 0
        // Predicated region
        $region49: #{tpu_custom_call.1} parent=47 // pred_check
          %p307 = pneg %p306
        $region50: #{tpu_custom_call.1} parent=47 // pred_check_branch
          %309 = sbr.rel (%p307) target = $region52
        $region51: #{tpu_custom_call.1} parent=47 // pred_region
          %310 = vst [vmem:[%s294] sm:$0xff] -inf
        $region52: #{tpu_custom_call.1} parent=47 // pred_fallthru
          _
        %v311 = vld [vmem:[%s303] sm:$0xff]
        %v312 = vld [vmem:[%s303 + $0x8] sm:$0xff]
        %v313 = vld [vmem:[%s303 + $0x10] sm:$0xff]
        %v314 = vld [vmem:[%s303 + $0x18] sm:$0xff]
        %v315 = vld [vmem:[%s303 + $0x20] sm:$0xff]
        %v316 = vld [vmem:[%s303 + $0x28] sm:$0xff]
        %v317 = vld [vmem:[%s303 + $0x30] sm:$0xff]
        %v318 = vld [vmem:[%s303 + $0x38] sm:$0xff]
        %v319 = vld [vmem:[%s303 + $0x40] sm:$0xff]
        %v320 = vld [vmem:[%s303 + $0x48] sm:$0xff]
        %v321 = vld [vmem:[%s303 + $0x50] sm:$0xff]
        %v322 = vld [vmem:[%s303 + $0x58] sm:$0xff]
        %v323 = vld [vmem:[%s303 + $0x60] sm:$0xff]
        %v324 = vld [vmem:[%s303 + $0x68] sm:$0xff]
        %v325 = vld [vmem:[%s303 + $0x70] sm:$0xff]
        %v326 = vld [vmem:[%s303 + $0x78] sm:$0xff]
        %v327 = vpack.c.bf16 %v312, %v311
        %v328 = vpack.c.bf16 %v314, %v313
        %v329 = vpack.c.bf16 %v316, %v315
        %v330 = vpack.c.bf16 %v318, %v317
        %v331 = vpack.c.bf16 %v320, %v319
        %v332 = vpack.c.bf16 %v322, %v321
        %v333 = vpack.c.bf16 %v324, %v323
        %v334 = vpack.c.bf16 %v326, %v325
        %v335 = vld [vmem:[%s1] sm:$0xf]
        %v336 = vld [vmem:[%s1 + $0x4] sm:$0xf]
        %v337 = vld [vmem:[%s2] sm:$0x1]
        %v339 = vperm.slane %v337, 0
        %v343 = vunpack.c.l.b16 %v335
        %v344 = vunpack.c.l.b16 %v336
        %v345 = vpack.c.b16 %v344, %v343
        %vm347 = vcmask 130048
        %v349 = vsel %vm347, %v327, 0
        %v352 = vsel %vm347, %v328, 0
        %v355 = vsel %vm347, %v329, 0
        %v358 = vsel %vm347, %v330, 0
        %v361 = vsel %vm347, %v331, 0
        %v364 = vsel %vm347, %v332, 0
        %v367 = vsel %vm347, %v333, 0
        %v370 = vsel %vm347, %v334, 0
        %372 = vmatpush.bf16.msra.mxu0 0
        %373 = vmatpush.bf16.msra.mxu0 0
        %374 = vmatpush.bf16.msra.mxu0 0
        %375 = vmatpush.bf16.msra.mxu0 0
        %376 = vmatpush.bf16.msra.mxu0 0
        %377 = vmatpush.bf16.msra.mxu0 0
        %378 = vmatpush.bf16.msra.mxu0 0
        %379 = vmatpush.bf16.msra.mxu0 %v345
        %380 = vmatmul.bf16.gmra.mxu0 %v349
        %v381 = vpop.f32.mrf.mxu0
        %v382 = vadd.f32 %v339, %v381
        %v383 = vpop.f32.mrf.mxu0
        %v384 = vadd.f32 %v339, %v383
        %385 = vmatmul.bf16.gmra.mxu0 %v352
        %v386 = vpop.f32.mrf.mxu0
        %v387 = vadd.f32 %v339, %v386
        %v388 = vpop.f32.mrf.mxu0
        %v389 = vadd.f32 %v339, %v388
        %390 = vmatmul.bf16.gmra.mxu0 %v355
        %v391 = vpop.f32.mrf.mxu0
        %v392 = vadd.f32 %v339, %v391
        %v393 = vpop.f32.mrf.mxu0
        %v394 = vadd.f32 %v339, %v393
        %395 = vmatmul.bf16.gmra.mxu0 %v358
        %v396 = vpop.f32.mrf.mxu0
        %v397 = vadd.f32 %v339, %v396
        %v398 = vpop.f32.mrf.mxu0
        %v399 = vadd.f32 %v339, %v398
        %400 = vmatmul.bf16.gmra.mxu0 %v361
        %v401 = vpop.f32.mrf.mxu0
        %v402 = vadd.f32 %v339, %v401
        %v403 = vpop.f32.mrf.mxu0
        %v404 = vadd.f32 %v339, %v403
        %405 = vmatmul.bf16.gmra.mxu0 %v364
        %v406 = vpop.f32.mrf.mxu0
        %v407 = vadd.f32 %v339, %v406
        %v408 = vpop.f32.mrf.mxu0
        %v409 = vadd.f32 %v339, %v408
        %410 = vmatmul.bf16.gmra.mxu0 %v367
        %v411 = vpop.f32.mrf.mxu0
        %v412 = vadd.f32 %v339, %v411
        %v413 = vpop.f32.mrf.mxu0
        %v414 = vadd.f32 %v339, %v413
        %415 = vmatmul.bf16.gmra.mxu0 %v370
        %v416 = vpop.f32.mrf.mxu0
        %v417 = vadd.f32 %v339, %v416
        %v418 = vpop.f32.mrf.mxu0
        %v419 = vadd.f32 %v339, %v418
        %420 = vdwg.mxu0
        %v421 = vmax.f32 %v382, 0.0
        %v422 = vmax.f32 %v384, 0.0
        %v423 = vmax.f32 %v387, 0.0
        %v424 = vmax.f32 %v389, 0.0
        %v425 = vmax.f32 %v392, 0.0
        %v426 = vmax.f32 %v394, 0.0
        %v427 = vmax.f32 %v397, 0.0
        %v428 = vmax.f32 %v399, 0.0
        %v429 = vmax.f32 %v402, 0.0
        %v430 = vmax.f32 %v404, 0.0
        %v431 = vmax.f32 %v407, 0.0
        %v432 = vmax.f32 %v409, 0.0
        %v433 = vmax.f32 %v412, 0.0
        %v434 = vmax.f32 %v414, 0.0
        %v435 = vmax.f32 %v417, 0.0
        %v436 = vmax.f32 %v419, 0.0
        %v437 = vpack.c.bf16 %v422, %v421
        %v438 = vpack.c.bf16 %v424, %v423
        %v439 = vpack.c.bf16 %v426, %v425
        %v440 = vpack.c.bf16 %v428, %v427
        %v441 = vpack.c.bf16 %v430, %v429
        %v442 = vpack.c.bf16 %v432, %v431
        %v443 = vpack.c.bf16 %v434, %v433
        %v444 = vpack.c.bf16 %v436, %v435
        %v445 = vld [vmem:[%s3] sm:$0xf]
        %v446 = vld [vmem:[%s3 + $0x4] sm:$0xf]
        %v447 = vld [vmem:[%s3 + $0x8] sm:$0xf]
        %v448 = vld [vmem:[%s3 + $0xc] sm:$0xf]
        %v449 = vld [vmem:[%s3 + $0x10] sm:$0xf]
        %v450 = vld [vmem:[%s3 + $0x14] sm:$0xf]
        %v451 = vld [vmem:[%s3 + $0x18] sm:$0xf]
        %v452 = vld [vmem:[%s3 + $0x1c] sm:$0xf]
        %v453 = vld [vmem:[%s4] sm:$0x1]
        %v455 = vperm.slane %v453, 0
        %v465 = vunpack.c.l.b16 %v445
        %v466 = vunpack.c.l.b16 %v446
        %v467 = vunpack.c.l.b16 %v447
        %v468 = vunpack.c.l.b16 %v448
        %v469 = vunpack.c.l.b16 %v449
        %v470 = vunpack.c.l.b16 %v450
        %v471 = vunpack.c.l.b16 %v451
        %v472 = vunpack.c.l.b16 %v452
        %v473 = vpack.c.b16 %v466, %v465
        %v474 = vpack.c.b16 %v468, %v467
        %v475 = vpack.c.b16 %v470, %v469
        %v476 = vpack.c.b16 %v472, %v471
        %vm481 = vcmask 523264
        %v483 = vsel %vm481, %v437, 0
        %v486 = vsel %vm481, %v438, 0
        %v489 = vsel %vm481, %v439, 0
        %v492 = vsel %vm481, %v440, 0
        %v495 = vsel %vm481, %v441, 0
        %v498 = vsel %vm481, %v442, 0
        %v501 = vsel %vm481, %v443, 0
        %v504 = vsel %vm481, %v444, 0
        %506 = vmatpush.bf16.msra.mxu0 0
        %507 = vmatpush.bf16.msra.mxu0 0
        %508 = vmatpush.bf16.msra.mxu0 0
        %509 = vmatpush.bf16.msra.mxu0 0
        %510 = vmatpush.bf16.msra.mxu0 %v476
        %511 = vmatpush.bf16.msra.mxu0 %v475
        %512 = vmatpush.bf16.msra.mxu0 %v474
        %513 = vmatpush.bf16.msra.mxu0 %v473
        %514 = vmatmul.bf16.gmra.mxu0 %v483
        %v515 = vpop.f32.mrf.mxu0
        %v516 = vadd.f32 %v455, %v515
        %v517 = vpop.f32.mrf.mxu0
        %v518 = vadd.f32 %v455, %v517
        %519 = vmatmul.bf16.gmra.mxu0 %v486
        %v520 = vpop.f32.mrf.mxu0
        %v521 = vadd.f32 %v455, %v520
        %v522 = vpop.f32.mrf.mxu0
        %v523 = vadd.f32 %v455, %v522
        %524 = vmatmul.bf16.gmra.mxu0 %v489
        %v525 = vpop.f32.mrf.mxu0
        %v526 = vadd.f32 %v455, %v525
        %v527 = vpop.f32.mrf.mxu0
        %v528 = vadd.f32 %v455, %v527
        %529 = vmatmul.bf16.gmra.mxu0 %v492
        %v530 = vpop.f32.mrf.mxu0
        %v531 = vadd.f32 %v455, %v530
        %v532 = vpop.f32.mrf.mxu0
        %v533 = vadd.f32 %v455, %v532
        %534 = vmatmul.bf16.gmra.mxu0 %v495
        %v535 = vpop.f32.mrf.mxu0
        %v536 = vadd.f32 %v455, %v535
        %v537 = vpop.f32.mrf.mxu0
        %v538 = vadd.f32 %v455, %v537
        %539 = vmatmul.bf16.gmra.mxu0 %v498
        %v540 = vpop.f32.mrf.mxu0
        %v541 = vadd.f32 %v455, %v540
        %v542 = vpop.f32.mrf.mxu0
        %v543 = vadd.f32 %v455, %v542
        %544 = vmatmul.bf16.gmra.mxu0 %v501
        %v545 = vpop.f32.mrf.mxu0
        %v546 = vadd.f32 %v455, %v545
        %v547 = vpop.f32.mrf.mxu0
        %v548 = vadd.f32 %v455, %v547
        %549 = vmatmul.bf16.gmra.mxu0 %v504
        %v550 = vpop.f32.mrf.mxu0
        %v551 = vadd.f32 %v455, %v550
        %v552 = vpop.f32.mrf.mxu0
        %v553 = vadd.f32 %v455, %v552
        %554 = vdwg.mxu0
        %v555 = vmax.f32 %v516, 0.0
        %v556 = vmax.f32 %v518, 0.0
        %v557 = vmax.f32 %v521, 0.0
        %v558 = vmax.f32 %v523, 0.0
        %v559 = vmax.f32 %v526, 0.0
        %v560 = vmax.f32 %v528, 0.0
        %v561 = vmax.f32 %v531, 0.0
        %v562 = vmax.f32 %v533, 0.0
        %v563 = vmax.f32 %v536, 0.0
        %v564 = vmax.f32 %v538, 0.0
        %v565 = vmax.f32 %v541, 0.0
        %v566 = vmax.f32 %v543, 0.0
        %v567 = vmax.f32 %v546, 0.0
        %v568 = vmax.f32 %v548, 0.0
        %v569 = vmax.f32 %v551, 0.0
        %v570 = vmax.f32 %v553, 0.0
        %v571 = vpack.c.bf16 %v556, %v555
        %v572 = vpack.c.bf16 %v558, %v557
        %v573 = vpack.c.bf16 %v560, %v559
        %v574 = vpack.c.bf16 %v562, %v561
        %v575 = vpack.c.bf16 %v564, %v563
        %v576 = vpack.c.bf16 %v566, %v565
        %v577 = vpack.c.bf16 %v568, %v567
        %v578 = vpack.c.bf16 %v570, %v569
        %v579 = vld [vmem:[%s5] sm:$0xff]
        %v580 = vld [vmem:[%s5 + $0x8] sm:$0xff]
        %v581 = vld [vmem:[%s5 + $0x10] sm:$0xff]
        %v582 = vld [vmem:[%s5 + $0x18] sm:$0xff]
        %v583 = vld [vmem:[%s5 + $0x20] sm:$0xff]
        %v584 = vld [vmem:[%s5 + $0x28] sm:$0xff]
        %v585 = vld [vmem:[%s5 + $0x30] sm:$0xff]
        %v586 = vld [vmem:[%s5 + $0x38] sm:$0xff]
        %v587 = vld [vmem:[%s5 + $0x40] sm:$0xff]
        %v588 = vld [vmem:[%s5 + $0x48] sm:$0xff]
        %v589 = vld [vmem:[%s5 + $0x50] sm:$0xff]
        %v590 = vld [vmem:[%s5 + $0x58] sm:$0xff]
        %v591 = vld [vmem:[%s5 + $0x60] sm:$0xff]
        %v592 = vld [vmem:[%s5 + $0x68] sm:$0xff]
        %v593 = vld [vmem:[%s5 + $0x70] sm:$0xff]
        %v594 = vld [vmem:[%s5 + $0x78] sm:$0xff]
        %v595 = vld [vmem:[%s5 + $0x80] sm:$0xff]
        %v596 = vld [vmem:[%s5 + $0x88] sm:$0xff]
        %v597 = vld [vmem:[%s5 + $0x90] sm:$0xff]
        %v598 = vld [vmem:[%s5 + $0x98] sm:$0xff]
        %v599 = vld [vmem:[%s5 + $0xa0] sm:$0xff]
        %v600 = vld [vmem:[%s5 + $0xa8] sm:$0xff]
        %v601 = vld [vmem:[%s5 + $0xb0] sm:$0xff]
        %v602 = vld [vmem:[%s5 + $0xb8] sm:$0xff]
        %v603 = vld [vmem:[%s5 + $0xc0] sm:$0xff]
        %v604 = vld [vmem:[%s5 + $0xc8] sm:$0xff]
        %v605 = vld [vmem:[%s5 + $0xd0] sm:$0xff]
        %v606 = vld [vmem:[%s5 + $0xd8] sm:$0xff]
        %v607 = vld [vmem:[%s5 + $0xe0] sm:$0xff]
        %v608 = vld [vmem:[%s5 + $0xe8] sm:$0xff]
        %v609 = vld [vmem:[%s5 + $0xf0] sm:$0xff]
        %v610 = vld [vmem:[%s5 + $0xf8] sm:$0xff]
        %v611 = vld [vmem:[%s5 + $0x100] sm:$0xff]
        %v612 = vld [vmem:[%s5 + $0x108] sm:$0xff]
        %v613 = vld [vmem:[%s5 + $0x110] sm:$0xff]
        %v614 = vld [vmem:[%s5 + $0x118] sm:$0xff]
        %v615 = vld [vmem:[%s5 + $0x120] sm:$0xff]
        %v616 = vld [vmem:[%s5 + $0x128] sm:$0xff]
        %v617 = vld [vmem:[%s5 + $0x130] sm:$0xff]
        %v618 = vld [vmem:[%s5 + $0x138] sm:$0xff]
        %v619 = vld [vmem:[%s5 + $0x140] sm:$0xff]
        %v620 = vld [vmem:[%s5 + $0x148] sm:$0xff]
        %v621 = vld [vmem:[%s5 + $0x150] sm:$0xff]
        %v622 = vld [vmem:[%s5 + $0x158] sm:$0xff]
        %v623 = vld [vmem:[%s5 + $0x160] sm:$0xff]
        %v624 = vld [vmem:[%s5 + $0x168] sm:$0xff]
        %v625 = vld [vmem:[%s5 + $0x170] sm:$0xff]
        %v626 = vld [vmem:[%s5 + $0x178] sm:$0xff]
        %v627 = vld [vmem:[%s5 + $0x180] sm:$0xff]
        %v628 = vld [vmem:[%s5 + $0x188] sm:$0xff]
        %v629 = vld [vmem:[%s5 + $0x190] sm:$0xff]
        %v630 = vld [vmem:[%s5 + $0x198] sm:$0xff]
        %v631 = vld [vmem:[%s5 + $0x1a0] sm:$0xff]
        %v632 = vld [vmem:[%s5 + $0x1a8] sm:$0xff]
        %v633 = vld [vmem:[%s5 + $0x1b0] sm:$0xff]
        %v634 = vld [vmem:[%s5 + $0x1b8] sm:$0xff]
        %v635 = vld [vmem:[%s5 + $0x1c0] sm:$0xff]
        %v636 = vld [vmem:[%s5 + $0x1c8] sm:$0xff]
        %v637 = vld [vmem:[%s5 + $0x1d0] sm:$0xff]
        %v638 = vld [vmem:[%s5 + $0x1d8] sm:$0xff]
        %v639 = vld [vmem:[%s5 + $0x1e0] sm:$0xff]
        %v640 = vld [vmem:[%s5 + $0x1e8] sm:$0xff]
        %v641 = vld [vmem:[%s5 + $0x1f0] sm:$0xff]
        %v642 = vld [vmem:[%s5 + $0x1f8] sm:$0xff]
        %v643 = vld [vmem:[%s6] sm:$0xff]
        %v645 = vperm.slane %v643, 0
        %v646 = vperm.slane %v643, 1
        %v647 = vperm.slane %v643, 2
        %v648 = vperm.slane %v643, 3
        %v649 = vperm.slane %v643, 4
        %v650 = vperm.slane %v643, 5
        %v651 = vperm.slane %v643, 6
        %v652 = vperm.slane %v643, 7
        %v725 = vunpack.c.l.b16 %v579
        %v726 = vunpack.c.h.b16 %v579
        %v727 = vunpack.c.l.b16 %v580
        %v728 = vunpack.c.h.b16 %v580
        %v729 = vunpack.c.l.b16 %v581
        %v730 = vunpack.c.h.b16 %v581
        %v731 = vunpack.c.l.b16 %v582
        %v732 = vunpack.c.h.b16 %v582
        %v733 = vunpack.c.l.b16 %v583
        %v734 = vunpack.c.h.b16 %v583
        %v735 = vunpack.c.l.b16 %v584
        %v736 = vunpack.c.h.b16 %v584
        %v737 = vunpack.c.l.b16 %v585
        %v738 = vunpack.c.h.b16 %v585
        %v739 = vunpack.c.l.b16 %v586
        %v740 = vunpack.c.h.b16 %v586
        %v741 = vunpack.c.l.b16 %v587
        %v742 = vunpack.c.h.b16 %v587
        %v743 = vunpack.c.l.b16 %v588
        %v744 = vunpack.c.h.b16 %v588
        %v745 = vunpack.c.l.b16 %v589
        %v746 = vunpack.c.h.b16 %v589
        %v747 = vunpack.c.l.b16 %v590
        %v748 = vunpack.c.h.b16 %v590
        %v749 = vunpack.c.l.b16 %v591
        %v750 = vunpack.c.h.b16 %v591
        %v751 = vunpack.c.l.b16 %v592
        %v752 = vunpack.c.h.b16 %v592
        %v753 = vunpack.c.l.b16 %v593
        %v754 = vunpack.c.h.b16 %v593
        %v755 = vunpack.c.l.b16 %v594
        %v756 = vunpack.c.h.b16 %v594
        %v757 = vunpack.c.l.b16 %v595
        %v758 = vunpack.c.h.b16 %v595
        %v759 = vunpack.c.l.b16 %v596
        %v760 = vunpack.c.h.b16 %v596
        %v761 = vunpack.c.l.b16 %v597
        %v762 = vunpack.c.h.b16 %v597
        %v763 = vunpack.c.l.b16 %v598
        %v764 = vunpack.c.h.b16 %v598
        %v765 = vunpack.c.l.b16 %v599
        %v766 = vunpack.c.h.b16 %v599
        %v767 = vunpack.c.l.b16 %v600
        %v768 = vunpack.c.h.b16 %v600
        %v769 = vunpack.c.l.b16 %v601
        %v770 = vunpack.c.h.b16 %v601
        %v771 = vunpack.c.l.b16 %v602
        %v772 = vunpack.c.h.b16 %v602
        %v773 = vunpack.c.l.b16 %v603
        %v774 = vunpack.c.h.b16 %v603
        %v775 = vunpack.c.l.b16 %v604
        %v776 = vunpack.c.h.b16 %v604
        %v777 = vunpack.c.l.b16 %v605
        %v778 = vunpack.c.h.b16 %v605
        %v779 = vunpack.c.l.b16 %v606
        %v780 = vunpack.c.h.b16 %v606
        %v781 = vunpack.c.l.b16 %v607
        %v782 = vunpack.c.h.b16 %v607
        %v783 = vunpack.c.l.b16 %v608
        %v784 = vunpack.c.h.b16 %v608
        %v785 = vunpack.c.l.b16 %v609
        %v786 = vunpack.c.h.b16 %v609
        %v787 = vunpack.c.l.b16 %v610
        %v788 = vunpack.c.h.b16 %v610
        %v789 = vunpack.c.l.b16 %v611
        %v790 = vunpack.c.h.b16 %v611
        %v791 = vunpack.c.l.b16 %v612
        %v792 = vunpack.c.h.b16 %v612
        %v793 = vunpack.c.l.b16 %v613
        %v794 = vunpack.c.h.b16 %v613
        %v795 = vunpack.c.l.b16 %v614
        %v796 = vunpack.c.h.b16 %v614
        %v797 = vunpack.c.l.b16 %v615
        %v798 = vunpack.c.h.b16 %v615
        %v799 = vunpack.c.l.b16 %v616
        %v800 = vunpack.c.h.b16 %v616
        %v801 = vunpack.c.l.b16 %v617
        %v802 = vunpack.c.h.b16 %v617
        %v803 = vunpack.c.l.b16 %v618
        %v804 = vunpack.c.h.b16 %v618
        %v805 = vunpack.c.l.b16 %v619
        %v806 = vunpack.c.h.b16 %v619
        %v807 = vunpack.c.l.b16 %v620
        %v808 = vunpack.c.h.b16 %v620
        %v809 = vunpack.c.l.b16 %v621
        %v810 = vunpack.c.h.b16 %v621
        %v811 = vunpack.c.l.b16 %v622
        %v812 = vunpack.c.h.b16 %v622
        %v813 = vunpack.c.l.b16 %v623
        %v814 = vunpack.c.h.b16 %v623
        %v815 = vunpack.c.l.b16 %v624
        %v816 = vunpack.c.h.b16 %v624
        %v817 = vunpack.c.l.b16 %v625
        %v818 = vunpack.c.h.b16 %v625
        %v819 = vunpack.c.l.b16 %v626
        %v820 = vunpack.c.h.b16 %v626
        %v821 = vunpack.c.l.b16 %v627
        %v822 = vunpack.c.h.b16 %v627
        %v823 = vunpack.c.l.b16 %v628
        %v824 = vunpack.c.h.b16 %v628
        %v825 = vunpack.c.l.b16 %v629
        %v826 = vunpack.c.h.b16 %v629
        %v827 = vunpack.c.l.b16 %v630
        %v828 = vunpack.c.h.b16 %v630
        %v829 = vunpack.c.l.b16 %v631
        %v830 = vunpack.c.h.b16 %v631
        %v831 = vunpack.c.l.b16 %v632
        %v832 = vunpack.c.h.b16 %v632
        %v833 = vunpack.c.l.b16 %v633
        %v834 = vunpack.c.h.b16 %v633
        %v835 = vunpack.c.l.b16 %v634
        %v836 = vunpack.c.h.b16 %v634
        %v837 = vunpack.c.l.b16 %v635
        %v838 = vunpack.c.h.b16 %v635
        %v839 = vunpack.c.l.b16 %v636
        %v840 = vunpack.c.h.b16 %v636
        %v841 = vunpack.c.l.b16 %v637
        %v842 = vunpack.c.h.b16 %v637
        %v843 = vunpack.c.l.b16 %v638
        %v844 = vunpack.c.h.b16 %v638
        %v845 = vunpack.c.l.b16 %v639
        %v846 = vunpack.c.h.b16 %v639
        %v847 = vunpack.c.l.b16 %v640
        %v848 = vunpack.c.h.b16 %v640
        %v849 = vunpack.c.l.b16 %v641
        %v850 = vunpack.c.h.b16 %v641
        %v851 = vunpack.c.l.b16 %v642
        %v852 = vunpack.c.h.b16 %v642
        %v853 = vpack.c.b16 %v733, %v725
        %v854 = vpack.c.b16 %v734, %v726
        %v855 = vpack.c.b16 %v735, %v727
        %v856 = vpack.c.b16 %v736, %v728
        %v857 = vpack.c.b16 %v737, %v729
        %v858 = vpack.c.b16 %v738, %v730
        %v859 = vpack.c.b16 %v739, %v731
        %v860 = vpack.c.b16 %v740, %v732
        %v861 = vpack.c.b16 %v749, %v741
        %v862 = vpack.c.b16 %v750, %v742
        %v863 = vpack.c.b16 %v751, %v743
        %v864 = vpack.c.b16 %v752, %v744
        %v865 = vpack.c.b16 %v753, %v745
        %v866 = vpack.c.b16 %v754, %v746
        %v867 = vpack.c.b16 %v755, %v747
        %v868 = vpack.c.b16 %v756, %v748
        %v869 = vpack.c.b16 %v765, %v757
        %v870 = vpack.c.b16 %v766, %v758
        %v871 = vpack.c.b16 %v767, %v759
        %v872 = vpack.c.b16 %v768, %v760
        %v873 = vpack.c.b16 %v769, %v761
        %v874 = vpack.c.b16 %v770, %v762
        %v875 = vpack.c.b16 %v771, %v763
        %v876 = vpack.c.b16 %v772, %v764
        %v877 = vpack.c.b16 %v781, %v773
        %v878 = vpack.c.b16 %v782, %v774
        %v879 = vpack.c.b16 %v783, %v775
        %v880 = vpack.c.b16 %v784, %v776
        %v881 = vpack.c.b16 %v785, %v777
        %v882 = vpack.c.b16 %v786, %v778
        %v883 = vpack.c.b16 %v787, %v779
        %v884 = vpack.c.b16 %v788, %v780
        %v885 = vpack.c.b16 %v797, %v789
        %v886 = vpack.c.b16 %v798, %v790
        %v887 = vpack.c.b16 %v799, %v791
        %v888 = vpack.c.b16 %v800, %v792
        %v889 = vpack.c.b16 %v801, %v793
        %v890 = vpack.c.b16 %v802, %v794
        %v891 = vpack.c.b16 %v803, %v795
        %v892 = vpack.c.b16 %v804, %v796
        %v893 = vpack.c.b16 %v813, %v805
        %v894 = vpack.c.b16 %v814, %v806
        %v895 = vpack.c.b16 %v815, %v807
        %v896 = vpack.c.b16 %v816, %v808
        %v897 = vpack.c.b16 %v817, %v809
        %v898 = vpack.c.b16 %v818, %v810
        %v899 = vpack.c.b16 %v819, %v811
        %v900 = vpack.c.b16 %v820, %v812
        %v901 = vpack.c.b16 %v829, %v821
        %v902 = vpack.c.b16 %v830, %v822
        %v903 = vpack.c.b16 %v831, %v823
        %v904 = vpack.c.b16 %v832, %v824
        %v905 = vpack.c.b16 %v833, %v825
        %v906 = vpack.c.b16 %v834, %v826
        %v907 = vpack.c.b16 %v835, %v827
        %v908 = vpack.c.b16 %v836, %v828
        %v909 = vpack.c.b16 %v845, %v837
        %v910 = vpack.c.b16 %v846, %v838
        %v911 = vpack.c.b16 %v847, %v839
        %v912 = vpack.c.b16 %v848, %v840
        %v913 = vpack.c.b16 %v849, %v841
        %v914 = vpack.c.b16 %v850, %v842
        %v915 = vpack.c.b16 %v851, %v843
        %v916 = vpack.c.b16 %v852, %v844
        %981 = vmatpush.bf16.msra.mxu0 %v909
        %982 = vmatpush.bf16.msra.mxu0 %v901
        %983 = vmatpush.bf16.msra.mxu0 %v893
        %984 = vmatpush.bf16.msra.mxu0 %v885
        %985 = vmatpush.bf16.msra.mxu0 %v877
        %986 = vmatpush.bf16.msra.mxu0 %v869
        %987 = vmatpush.bf16.msra.mxu0 %v861
        %988 = vmatpush.bf16.msra.mxu0 %v853
        %989 = vmatmul.bf16.gmra.mxu0 %v571
        %v990 = vpop.f32.mrf.mxu0
        %v991 = vadd.f32 %v645, %v990
        %v992 = vpop.f32.mrf.mxu0
        %v993 = vadd.f32 %v645, %v992
        %994 = vmatmul.bf16.gmra.mxu0 %v572
        %v995 = vpop.f32.mrf.mxu0
        %v996 = vadd.f32 %v645, %v995
        %v997 = vpop.f32.mrf.mxu0
        %v998 = vadd.f32 %v645, %v997
        %999 = vmatmul.bf16.gmra.mxu0 %v573
        %v1000 = vpop.f32.mrf.mxu0
        %v1001 = vadd.f32 %v645, %v1000
        %v1002 = vpop.f32.mrf.mxu0
        %v1003 = vadd.f32 %v645, %v1002
        %1004 = vmatmul.bf16.gmra.mxu0 %v574
        %v1005 = vpop.f32.mrf.mxu0
        %v1006 = vadd.f32 %v645, %v1005
        %v1007 = vpop.f32.mrf.mxu0
        %v1008 = vadd.f32 %v645, %v1007
        %1009 = vmatmul.bf16.gmra.mxu0 %v575
        %v1010 = vpop.f32.mrf.mxu0
        %v1011 = vadd.f32 %v645, %v1010
        %v1012 = vpop.f32.mrf.mxu0
        %v1013 = vadd.f32 %v645, %v1012
        %1014 = vmatmul.bf16.gmra.mxu0 %v576
        %v1015 = vpop.f32.mrf.mxu0
        %v1016 = vadd.f32 %v645, %v1015
        %v1017 = vpop.f32.mrf.mxu0
        %v1018 = vadd.f32 %v645, %v1017
        %1019 = vmatmul.bf16.gmra.mxu0 %v577
        %v1020 = vpop.f32.mrf.mxu0
        %v1021 = vadd.f32 %v645, %v1020
        %v1022 = vpop.f32.mrf.mxu0
        %v1023 = vadd.f32 %v645, %v1022
        %1024 = vmatmul.bf16.gmra.mxu0 %v578
        %v1025 = vpop.f32.mrf.mxu0
        %v1026 = vadd.f32 %v645, %v1025
        %v1027 = vpop.f32.mrf.mxu0
        %v1028 = vadd.f32 %v645, %v1027
        %1029 = vdwg.mxu0
        %1030 = vmatpush.bf16.msra.mxu0 %v910
        %1031 = vmatpush.bf16.msra.mxu0 %v902
        %1032 = vmatpush.bf16.msra.mxu0 %v894
        %1033 = vmatpush.bf16.msra.mxu0 %v886
        %1034 = vmatpush.bf16.msra.mxu0 %v878
        %1035 = vmatpush.bf16.msra.mxu0 %v870
        %1036 = vmatpush.bf16.msra.mxu0 %v862
        %1037 = vmatpush.bf16.msra.mxu0 %v854
        %1038 = vmatmul.bf16.gmra.mxu0 %v571
        %v1039 = vpop.f32.mrf.mxu0
        %v1040 = vadd.f32 %v646, %v1039
        %v1041 = vpop.f32.mrf.mxu0
        %v1042 = vadd.f32 %v646, %v1041
        %1043 = vmatmul.bf16.gmra.mxu0 %v572
        %v1044 = vpop.f32.mrf.mxu0
        %v1045 = vadd.f32 %v646, %v1044
        %v1046 = vpop.f32.mrf.mxu0
        %v1047 = vadd.f32 %v646, %v1046
        %1048 = vmatmul.bf16.gmra.mxu0 %v573
        %v1049 = vpop.f32.mrf.mxu0
        %v1050 = vadd.f32 %v646, %v1049
        %v1051 = vpop.f32.mrf.mxu0
        %v1052 = vadd.f32 %v646, %v1051
        %1053 = vmatmul.bf16.gmra.mxu0 %v574
        %v1054 = vpop.f32.mrf.mxu0
        %v1055 = vadd.f32 %v646, %v1054
        %v1056 = vpop.f32.mrf.mxu0
        %v1057 = vadd.f32 %v646, %v1056
        %1058 = vmatmul.bf16.gmra.mxu0 %v575
        %v1059 = vpop.f32.mrf.mxu0
        %v1060 = vadd.f32 %v646, %v1059
        %v1061 = vpop.f32.mrf.mxu0
        %v1062 = vadd.f32 %v646, %v1061
        %1063 = vmatmul.bf16.gmra.mxu0 %v576
        %v1064 = vpop.f32.mrf.mxu0
        %v1065 = vadd.f32 %v646, %v1064
        %v1066 = vpop.f32.mrf.mxu0
        %v1067 = vadd.f32 %v646, %v1066
        %1068 = vmatmul.bf16.gmra.mxu0 %v577
        %v1069 = vpop.f32.mrf.mxu0
        %v1070 = vadd.f32 %v646, %v1069
        %v1071 = vpop.f32.mrf.mxu0
        %v1072 = vadd.f32 %v646, %v1071
        %1073 = vmatmul.bf16.gmra.mxu0 %v578
        %v1074 = vpop.f32.mrf.mxu0
        %v1075 = vadd.f32 %v646, %v1074
        %v1076 = vpop.f32.mrf.mxu0
        %v1077 = vadd.f32 %v646, %v1076
        %1078 = vdwg.mxu0
        %1079 = vmatpush.bf16.msra.mxu0 %v911
        %1080 = vmatpush.bf16.msra.mxu0 %v903
        %1081 = vmatpush.bf16.msra.mxu0 %v895
        %1082 = vmatpush.bf16.msra.mxu0 %v887
        %1083 = vmatpush.bf16.msra.mxu0 %v879
        %1084 = vmatpush.bf16.msra.mxu0 %v871
        %1085 = vmatpush.bf16.msra.mxu0 %v863
        %1086 = vmatpush.bf16.msra.mxu0 %v855
        %1087 = vmatmul.bf16.gmra.mxu0 %v571
        %v1088 = vpop.f32.mrf.mxu0
        %v1089 = vadd.f32 %v647, %v1088
        %v1090 = vpop.f32.mrf.mxu0
        %v1091 = vadd.f32 %v647, %v1090
        %1092 = vmatmul.bf16.gmra.mxu0 %v572
        %v1093 = vpop.f32.mrf.mxu0
        %v1094 = vadd.f32 %v647, %v1093
        %v1095 = vpop.f32.mrf.mxu0
        %v1096 = vadd.f32 %v647, %v1095
        %1097 = vmatmul.bf16.gmra.mxu0 %v573
        %v1098 = vpop.f32.mrf.mxu0
        %v1099 = vadd.f32 %v647, %v1098
        %v1100 = vpop.f32.mrf.mxu0
        %v1101 = vadd.f32 %v647, %v1100
        %1102 = vmatmul.bf16.gmra.mxu0 %v574
        %v1103 = vpop.f32.mrf.mxu0
        %v1104 = vadd.f32 %v647, %v1103
        %v1105 = vpop.f32.mrf.mxu0
        %v1106 = vadd.f32 %v647, %v1105
        %1107 = vmatmul.bf16.gmra.mxu0 %v575
        %v1108 = vpop.f32.mrf.mxu0
        %v1109 = vadd.f32 %v647, %v1108
        %v1110 = vpop.f32.mrf.mxu0
        %v1111 = vadd.f32 %v647, %v1110
        %1112 = vmatmul.bf16.gmra.mxu0 %v576
        %v1113 = vpop.f32.mrf.mxu0
        %v1114 = vadd.f32 %v647, %v1113
        %v1115 = vpop.f32.mrf.mxu0
        %v1116 = vadd.f32 %v647, %v1115
        %1117 = vmatmul.bf16.gmra.mxu0 %v577
        %v1118 = vpop.f32.mrf.mxu0
        %v1119 = vadd.f32 %v647, %v1118
        %v1120 = vpop.f32.mrf.mxu0
        %v1121 = vadd.f32 %v647, %v1120
        %1122 = vmatmul.bf16.gmra.mxu0 %v578
        %v1123 = vpop.f32.mrf.mxu0
        %v1124 = vadd.f32 %v647, %v1123
        %v1125 = vpop.f32.mrf.mxu0
        %v1126 = vadd.f32 %v647, %v1125
        %1127 = vdwg.mxu0
        %1128 = vmatpush.bf16.msra.mxu0 %v912
        %1129 = vmatpush.bf16.msra.mxu0 %v904
        %1130 = vmatpush.bf16.msra.mxu0 %v896
        %1131 = vmatpush.bf16.msra.mxu0 %v888
        %1132 = vmatpush.bf16.msra.mxu0 %v880
        %1133 = vmatpush.bf16.msra.mxu0 %v872
        %1134 = vmatpush.bf16.msra.mxu0 %v864
        %1135 = vmatpush.bf16.msra.mxu0 %v856
        %1136 = vmatmul.bf16.gmra.mxu0 %v571
        %v1137 = vpop.f32.mrf.mxu0
        %v1138 = vadd.f32 %v648, %v1137
        %v1139 = vpop.f32.mrf.mxu0
        %v1140 = vadd.f32 %v648, %v1139
        %1141 = vmatmul.bf16.gmra.mxu0 %v572
        %v1142 = vpop.f32.mrf.mxu0
        %v1143 = vadd.f32 %v648, %v1142
        %v1144 = vpop.f32.mrf.mxu0
        %v1145 = vadd.f32 %v648, %v1144
        %1146 = vmatmul.bf16.gmra.mxu0 %v573
        %v1147 = vpop.f32.mrf.mxu0
        %v1148 = vadd.f32 %v648, %v1147
        %v1149 = vpop.f32.mrf.mxu0
        %v1150 = vadd.f32 %v648, %v1149
        %1151 = vmatmul.bf16.gmra.mxu0 %v574
        %v1152 = vpop.f32.mrf.mxu0
        %v1153 = vadd.f32 %v648, %v1152
        %v1154 = vpop.f32.mrf.mxu0
        %v1155 = vadd.f32 %v648, %v1154
        %1156 = vmatmul.bf16.gmra.mxu0 %v575
        %v1157 = vpop.f32.mrf.mxu0
        %v1158 = vadd.f32 %v648, %v1157
        %v1159 = vpop.f32.mrf.mxu0
        %v1160 = vadd.f32 %v648, %v1159
        %1161 = vmatmul.bf16.gmra.mxu0 %v576
        %v1162 = vpop.f32.mrf.mxu0
        %v1163 = vadd.f32 %v648, %v1162
        %v1164 = vpop.f32.mrf.mxu0
        %v1165 = vadd.f32 %v648, %v1164
        %1166 = vmatmul.bf16.gmra.mxu0 %v577
        %v1167 = vpop.f32.mrf.mxu0
        %v1168 = vadd.f32 %v648, %v1167
        %v1169 = vpop.f32.mrf.mxu0
        %v1170 = vadd.f32 %v648, %v1169
        %1171 = vmatmul.bf16.gmra.mxu0 %v578
        %v1172 = vpop.f32.mrf.mxu0
        %v1173 = vadd.f32 %v648, %v1172
        %v1174 = vpop.f32.mrf.mxu0
        %v1175 = vadd.f32 %v648, %v1174
        %1176 = vdwg.mxu0
        %1177 = vmatpush.bf16.msra.mxu0 %v913
        %1178 = vmatpush.bf16.msra.mxu0 %v905
        %1179 = vmatpush.bf16.msra.mxu0 %v897
        %1180 = vmatpush.bf16.msra.mxu0 %v889
        %1181 = vmatpush.bf16.msra.mxu0 %v881
        %1182 = vmatpush.bf16.msra.mxu0 %v873
        %1183 = vmatpush.bf16.msra.mxu0 %v865
        %1184 = vmatpush.bf16.msra.mxu0 %v857
        %1185 = vmatmul.bf16.gmra.mxu0 %v571
        %v1186 = vpop.f32.mrf.mxu0
        %v1187 = vadd.f32 %v649, %v1186
        %v1188 = vpop.f32.mrf.mxu0
        %v1189 = vadd.f32 %v649, %v1188
        %1190 = vmatmul.bf16.gmra.mxu0 %v572
        %v1191 = vpop.f32.mrf.mxu0
        %v1192 = vadd.f32 %v649, %v1191
        %v1193 = vpop.f32.mrf.mxu0
        %v1194 = vadd.f32 %v649, %v1193
        %1195 = vmatmul.bf16.gmra.mxu0 %v573
        %v1196 = vpop.f32.mrf.mxu0
        %v1197 = vadd.f32 %v649, %v1196
        %v1198 = vpop.f32.mrf.mxu0
        %v1199 = vadd.f32 %v649, %v1198
        %1200 = vmatmul.bf16.gmra.mxu0 %v574
        %v1201 = vpop.f32.mrf.mxu0
        %v1202 = vadd.f32 %v649, %v1201
        %v1203 = vpop.f32.mrf.mxu0
        %v1204 = vadd.f32 %v649, %v1203
        %1205 = vmatmul.bf16.gmra.mxu0 %v575
        %v1206 = vpop.f32.mrf.mxu0
        %v1207 = vadd.f32 %v649, %v1206
        %v1208 = vpop.f32.mrf.mxu0
        %v1209 = vadd.f32 %v649, %v1208
        %1210 = vmatmul.bf16.gmra.mxu0 %v576
        %v1211 = vpop.f32.mrf.mxu0
        %v1212 = vadd.f32 %v649, %v1211
        %v1213 = vpop.f32.mrf.mxu0
        %v1214 = vadd.f32 %v649, %v1213
        %1215 = vmatmul.bf16.gmra.mxu0 %v577
        %v1216 = vpop.f32.mrf.mxu0
        %v1217 = vadd.f32 %v649, %v1216
        %v1218 = vpop.f32.mrf.mxu0
        %v1219 = vadd.f32 %v649, %v1218
        %1220 = vmatmul.bf16.gmra.mxu0 %v578
        %v1221 = vpop.f32.mrf.mxu0
        %v1222 = vadd.f32 %v649, %v1221
        %v1223 = vpop.f32.mrf.mxu0
        %v1224 = vadd.f32 %v649, %v1223
        %1225 = vdwg.mxu0
        %1226 = vmatpush.bf16.msra.mxu0 %v914
        %1227 = vmatpush.bf16.msra.mxu0 %v906
        %1228 = vmatpush.bf16.msra.mxu0 %v898
        %1229 = vmatpush.bf16.msra.mxu0 %v890
        %1230 = vmatpush.bf16.msra.mxu0 %v882
        %1231 = vmatpush.bf16.msra.mxu0 %v874
        %1232 = vmatpush.bf16.msra.mxu0 %v866
        %1233 = vmatpush.bf16.msra.mxu0 %v858
        %1234 = vmatmul.bf16.gmra.mxu0 %v571
        %v1235 = vpop.f32.mrf.mxu0
        %v1236 = vadd.f32 %v650, %v1235
        %v1237 = vpop.f32.mrf.mxu0
        %v1238 = vadd.f32 %v650, %v1237
        %1239 = vmatmul.bf16.gmra.mxu0 %v572
        %v1240 = vpop.f32.mrf.mxu0
        %v1241 = vadd.f32 %v650, %v1240
        %v1242 = vpop.f32.mrf.mxu0
        %v1243 = vadd.f32 %v650, %v1242
        %1244 = vmatmul.bf16.gmra.mxu0 %v573
        %v1245 = vpop.f32.mrf.mxu0
        %v1246 = vadd.f32 %v650, %v1245
        %v1247 = vpop.f32.mrf.mxu0
        %v1248 = vadd.f32 %v650, %v1247
        %1249 = vmatmul.bf16.gmra.mxu0 %v574
        %v1250 = vpop.f32.mrf.mxu0
        %v1251 = vadd.f32 %v650, %v1250
        %v1252 = vpop.f32.mrf.mxu0
        %v1253 = vadd.f32 %v650, %v1252
        %1254 = vmatmul.bf16.gmra.mxu0 %v575
        %v1255 = vpop.f32.mrf.mxu0
        %v1256 = vadd.f32 %v650, %v1255
        %v1257 = vpop.f32.mrf.mxu0
        %v1258 = vadd.f32 %v650, %v1257
        %1259 = vmatmul.bf16.gmra.mxu0 %v576
        %v1260 = vpop.f32.mrf.mxu0
        %v1261 = vadd.f32 %v650, %v1260
        %v1262 = vpop.f32.mrf.mxu0
        %v1263 = vadd.f32 %v650, %v1262
        %1264 = vmatmul.bf16.gmra.mxu0 %v577
        %v1265 = vpop.f32.mrf.mxu0
        %v1266 = vadd.f32 %v650, %v1265
        %v1267 = vpop.f32.mrf.mxu0
        %v1268 = vadd.f32 %v650, %v1267
        %1269 = vmatmul.bf16.gmra.mxu0 %v578
        %v1270 = vpop.f32.mrf.mxu0
        %v1271 = vadd.f32 %v650, %v1270
        %v1272 = vpop.f32.mrf.mxu0
        %v1273 = vadd.f32 %v650, %v1272
        %1274 = vdwg.mxu0
        %1275 = vmatpush.bf16.msra.mxu0 %v915
        %1276 = vmatpush.bf16.msra.mxu0 %v907
        %1277 = vmatpush.bf16.msra.mxu0 %v899
        %1278 = vmatpush.bf16.msra.mxu0 %v891
        %1279 = vmatpush.bf16.msra.mxu0 %v883
        %1280 = vmatpush.bf16.msra.mxu0 %v875
        %1281 = vmatpush.bf16.msra.mxu0 %v867
        %1282 = vmatpush.bf16.msra.mxu0 %v859
        %1283 = vmatmul.bf16.gmra.mxu0 %v571
        %v1284 = vpop.f32.mrf.mxu0
        %v1285 = vadd.f32 %v651, %v1284
        %v1286 = vpop.f32.mrf.mxu0
        %v1287 = vadd.f32 %v651, %v1286
        %1288 = vmatmul.bf16.gmra.mxu0 %v572
        %v1289 = vpop.f32.mrf.mxu0
        %v1290 = vadd.f32 %v651, %v1289
        %v1291 = vpop.f32.mrf.mxu0
        %v1292 = vadd.f32 %v651, %v1291
        %1293 = vmatmul.bf16.gmra.mxu0 %v573
        %v1294 = vpop.f32.mrf.mxu0
        %v1295 = vadd.f32 %v651, %v1294
        %v1296 = vpop.f32.mrf.mxu0
        %v1297 = vadd.f32 %v651, %v1296
        %1298 = vmatmul.bf16.gmra.mxu0 %v574
        %v1299 = vpop.f32.mrf.mxu0
        %v1300 = vadd.f32 %v651, %v1299
        %v1301 = vpop.f32.mrf.mxu0
        %v1302 = vadd.f32 %v651, %v1301
        %1303 = vmatmul.bf16.gmra.mxu0 %v575
        %v1304 = vpop.f32.mrf.mxu0
        %v1305 = vadd.f32 %v651, %v1304
        %v1306 = vpop.f32.mrf.mxu0
        %v1307 = vadd.f32 %v651, %v1306
        %1308 = vmatmul.bf16.gmra.mxu0 %v576
        %v1309 = vpop.f32.mrf.mxu0
        %v1310 = vadd.f32 %v651, %v1309
        %v1311 = vpop.f32.mrf.mxu0
        %v1312 = vadd.f32 %v651, %v1311
        %1313 = vmatmul.bf16.gmra.mxu0 %v577
        %v1314 = vpop.f32.mrf.mxu0
        %v1315 = vadd.f32 %v651, %v1314
        %v1316 = vpop.f32.mrf.mxu0
        %v1317 = vadd.f32 %v651, %v1316
        %1318 = vmatmul.bf16.gmra.mxu0 %v578
        %v1319 = vpop.f32.mrf.mxu0
        %v1320 = vadd.f32 %v651, %v1319
        %v1321 = vpop.f32.mrf.mxu0
        %v1322 = vadd.f32 %v651, %v1321
        %1323 = vdwg.mxu0
        %1324 = vmatpush.bf16.msra.mxu0 %v916
        %1325 = vmatpush.bf16.msra.mxu0 %v908
        %1326 = vmatpush.bf16.msra.mxu0 %v900
        %1327 = vmatpush.bf16.msra.mxu0 %v892
        %1328 = vmatpush.bf16.msra.mxu0 %v884
        %1329 = vmatpush.bf16.msra.mxu0 %v876
        %1330 = vmatpush.bf16.msra.mxu0 %v868
        %1331 = vmatpush.bf16.msra.mxu0 %v860
        %1332 = vmatmul.bf16.gmra.mxu0 %v571
        %v1333 = vpop.f32.mrf.mxu0
        %v1334 = vadd.f32 %v652, %v1333
        %v1335 = vpop.f32.mrf.mxu0
        %v1336 = vadd.f32 %v652, %v1335
        %1337 = vmatmul.bf16.gmra.mxu0 %v572
        %v1338 = vpop.f32.mrf.mxu0
        %v1339 = vadd.f32 %v652, %v1338
        %v1340 = vpop.f32.mrf.mxu0
        %v1341 = vadd.f32 %v652, %v1340
        %1342 = vmatmul.bf16.gmra.mxu0 %v573
        %v1343 = vpop.f32.mrf.mxu0
        %v1344 = vadd.f32 %v652, %v1343
        %v1345 = vpop.f32.mrf.mxu0
        %v1346 = vadd.f32 %v652, %v1345
        %1347 = vmatmul.bf16.gmra.mxu0 %v574
        %v1348 = vpop.f32.mrf.mxu0
        %v1349 = vadd.f32 %v652, %v1348
        %v1350 = vpop.f32.mrf.mxu0
        %v1351 = vadd.f32 %v652, %v1350
        %1352 = vmatmul.bf16.gmra.mxu0 %v575
        %v1353 = vpop.f32.mrf.mxu0
        %v1354 = vadd.f32 %v652, %v1353
        %v1355 = vpop.f32.mrf.mxu0
        %v1356 = vadd.f32 %v652, %v1355
        %1357 = vmatmul.bf16.gmra.mxu0 %v576
        %v1358 = vpop.f32.mrf.mxu0
        %v1359 = vadd.f32 %v652, %v1358
        %v1360 = vpop.f32.mrf.mxu0
        %v1361 = vadd.f32 %v652, %v1360
        %1362 = vmatmul.bf16.gmra.mxu0 %v577
        %v1363 = vpop.f32.mrf.mxu0
        %v1364 = vadd.f32 %v652, %v1363
        %v1365 = vpop.f32.mrf.mxu0
        %v1366 = vadd.f32 %v652, %v1365
        %1367 = vmatmul.bf16.gmra.mxu0 %v578
        %v1368 = vpop.f32.mrf.mxu0
        %v1369 = vadd.f32 %v652, %v1368
        %v1370 = vpop.f32.mrf.mxu0
        %v1371 = vadd.f32 %v652, %v1370
        %1372 = vdwg.mxu0
        %v1373 = vmax.f32 %v991, 0.0
        %v1374 = vmax.f32 %v1040, 0.0
        %v1375 = vmax.f32 %v1089, 0.0
        %v1376 = vmax.f32 %v1138, 0.0
        %v1377 = vmax.f32 %v1187, 0.0
        %v1378 = vmax.f32 %v1236, 0.0
        %v1379 = vmax.f32 %v1285, 0.0
        %v1380 = vmax.f32 %v1334, 0.0
        %v1381 = vmax.f32 %v993, 0.0
        %v1382 = vmax.f32 %v1042, 0.0
        %v1383 = vmax.f32 %v1091, 0.0
        %v1384 = vmax.f32 %v1140, 0.0
        %v1385 = vmax.f32 %v1189, 0.0
        %v1386 = vmax.f32 %v1238, 0.0
        %v1387 = vmax.f32 %v1287, 0.0
        %v1388 = vmax.f32 %v1336, 0.0
        %v1389 = vmax.f32 %v996, 0.0
        %v1390 = vmax.f32 %v1045, 0.0
        %v1391 = vmax.f32 %v1094, 0.0
        %v1392 = vmax.f32 %v1143, 0.0
        %v1393 = vmax.f32 %v1192, 0.0
        %v1394 = vmax.f32 %v1241, 0.0
        %v1395 = vmax.f32 %v1290, 0.0
        %v1396 = vmax.f32 %v1339, 0.0
        %v1397 = vmax.f32 %v998, 0.0
        %v1398 = vmax.f32 %v1047, 0.0
        %v1399 = vmax.f32 %v1096, 0.0
        %v1400 = vmax.f32 %v1145, 0.0
        %v1401 = vmax.f32 %v1194, 0.0
        %v1402 = vmax.f32 %v1243, 0.0
        %v1403 = vmax.f32 %v1292, 0.0
        %v1404 = vmax.f32 %v1341, 0.0
        %v1405 = vmax.f32 %v1001, 0.0
        %v1406 = vmax.f32 %v1050, 0.0
        %v1407 = vmax.f32 %v1099, 0.0
        %v1408 = vmax.f32 %v1148, 0.0
        %v1409 = vmax.f32 %v1197, 0.0
        %v1410 = vmax.f32 %v1246, 0.0
        %v1411 = vmax.f32 %v1295, 0.0
        %v1412 = vmax.f32 %v1344, 0.0
        %v1413 = vmax.f32 %v1003, 0.0
        %v1414 = vmax.f32 %v1052, 0.0
        %v1415 = vmax.f32 %v1101, 0.0
        %v1416 = vmax.f32 %v1150, 0.0
        %v1417 = vmax.f32 %v1199, 0.0
        %v1418 = vmax.f32 %v1248, 0.0
        %v1419 = vmax.f32 %v1297, 0.0
        %v1420 = vmax.f32 %v1346, 0.0
        %v1421 = vmax.f32 %v1006, 0.0
        %v1422 = vmax.f32 %v1055, 0.0
        %v1423 = vmax.f32 %v1104, 0.0
        %v1424 = vmax.f32 %v1153, 0.0
        %v1425 = vmax.f32 %v1202, 0.0
        %v1426 = vmax.f32 %v1251, 0.0
        %v1427 = vmax.f32 %v1300, 0.0
        %v1428 = vmax.f32 %v1349, 0.0
        %v1429 = vmax.f32 %v1008, 0.0
        %v1430 = vmax.f32 %v1057, 0.0
        %v1431 = vmax.f32 %v1106, 0.0
        %v1432 = vmax.f32 %v1155, 0.0
        %v1433 = vmax.f32 %v1204, 0.0
        %v1434 = vmax.f32 %v1253, 0.0
        %v1435 = vmax.f32 %v1302, 0.0
        %v1436 = vmax.f32 %v1351, 0.0
        %v1437 = vmax.f32 %v1011, 0.0
        %v1438 = vmax.f32 %v1060, 0.0
        %v1439 = vmax.f32 %v1109, 0.0
        %v1440 = vmax.f32 %v1158, 0.0
        %v1441 = vmax.f32 %v1207, 0.0
        %v1442 = vmax.f32 %v1256, 0.0
        %v1443 = vmax.f32 %v1305, 0.0
        %v1444 = vmax.f32 %v1354, 0.0
        %v1445 = vmax.f32 %v1013, 0.0
        %v1446 = vmax.f32 %v1062, 0.0
        %v1447 = vmax.f32 %v1111, 0.0
        %v1448 = vmax.f32 %v1160, 0.0
        %v1449 = vmax.f32 %v1209, 0.0
        %v1450 = vmax.f32 %v1258, 0.0
        %v1451 = vmax.f32 %v1307, 0.0
        %v1452 = vmax.f32 %v1356, 0.0
        %v1453 = vmax.f32 %v1016, 0.0
        %v1454 = vmax.f32 %v1065, 0.0
        %v1455 = vmax.f32 %v1114, 0.0
        %v1456 = vmax.f32 %v1163, 0.0
        %v1457 = vmax.f32 %v1212, 0.0
        %v1458 = vmax.f32 %v1261, 0.0
        %v1459 = vmax.f32 %v1310, 0.0
        %v1460 = vmax.f32 %v1359, 0.0
        %v1461 = vmax.f32 %v1018, 0.0
        %v1462 = vmax.f32 %v1067, 0.0
        %v1463 = vmax.f32 %v1116, 0.0
        %v1464 = vmax.f32 %v1165, 0.0
        %v1465 = vmax.f32 %v1214, 0.0
        %v1466 = vmax.f32 %v1263, 0.0
        %v1467 = vmax.f32 %v1312, 0.0
        %v1468 = vmax.f32 %v1361, 0.0
        %v1469 = vmax.f32 %v1021, 0.0
        %v1470 = vmax.f32 %v1070, 0.0
        %v1471 = vmax.f32 %v1119, 0.0
        %v1472 = vmax.f32 %v1168, 0.0
        %v1473 = vmax.f32 %v1217, 0.0
        %v1474 = vmax.f32 %v1266, 0.0
        %v1475 = vmax.f32 %v1315, 0.0
        %v1476 = vmax.f32 %v1364, 0.0
        %v1477 = vmax.f32 %v1023, 0.0
        %v1478 = vmax.f32 %v1072, 0.0
        %v1479 = vmax.f32 %v1121, 0.0
        %v1480 = vmax.f32 %v1170, 0.0
        %v1481 = vmax.f32 %v1219, 0.0
        %v1482 = vmax.f32 %v1268, 0.0
        %v1483 = vmax.f32 %v1317, 0.0
        %v1484 = vmax.f32 %v1366, 0.0
        %v1485 = vmax.f32 %v1026, 0.0
        %v1486 = vmax.f32 %v1075, 0.0
        %v1487 = vmax.f32 %v1124, 0.0
        %v1488 = vmax.f32 %v1173, 0.0
        %v1489 = vmax.f32 %v1222, 0.0
        %v1490 = vmax.f32 %v1271, 0.0
        %v1491 = vmax.f32 %v1320, 0.0
        %v1492 = vmax.f32 %v1369, 0.0
        %v1493 = vmax.f32 %v1028, 0.0
        %v1494 = vmax.f32 %v1077, 0.0
        %v1495 = vmax.f32 %v1126, 0.0
        %v1496 = vmax.f32 %v1175, 0.0
        %v1497 = vmax.f32 %v1224, 0.0
        %v1498 = vmax.f32 %v1273, 0.0
        %v1499 = vmax.f32 %v1322, 0.0
        %v1500 = vmax.f32 %v1371, 0.0
        %v1501 = vmax.f32 %v1373, %v1381
        %v1502 = vmax.f32 %v1501, %v1389
        %v1503 = vmax.f32 %v1502, %v1397
        %v1504 = vmax.f32 %v1503, %v1405
        %v1505 = vmax.f32 %v1504, %v1413
        %v1506 = vmax.f32 %v1505, %v1421
        %v1507 = vmax.f32 %v1506, %v1429
        %v1508 = vmax.f32 %v1507, %v1437
        %v1509 = vmax.f32 %v1508, %v1445
        %v1510 = vmax.f32 %v1509, %v1453
        %v1511 = vmax.f32 %v1510, %v1461
        %v1512 = vmax.f32 %v1511, %v1469
        %v1513 = vmax.f32 %v1512, %v1477
        %v1514 = vmax.f32 %v1513, %v1485
        %v1515 = vmax.f32 %v1514, %v1493
        %v1516 = vrot.slane %v1515, 4
        %v1517 = vmax.f32 %v1515, %v1516
        %v1518 = vrot.slane %v1517, 2
        %v1519 = vmax.f32 %v1517, %v1518
        %v1520 = vrot.slane %v1519, 1
        %v1521 = vmax.f32 %v1519, %v1520
        %v1522 = vmax.f32 %v1374, %v1382
        %v1523 = vmax.f32 %v1522, %v1390
        %v1524 = vmax.f32 %v1523, %v1398
        %v1525 = vmax.f32 %v1524, %v1406
        %v1526 = vmax.f32 %v1525, %v1414
        %v1527 = vmax.f32 %v1526, %v1422
        %v1528 = vmax.f32 %v1527, %v1430
        %v1529 = vmax.f32 %v1528, %v1438
        %v1530 = vmax.f32 %v1529, %v1446
        %v1531 = vmax.f32 %v1530, %v1454
        %v1532 = vmax.f32 %v1531, %v1462
        %v1533 = vmax.f32 %v1532, %v1470
        %v1534 = vmax.f32 %v1533, %v1478
        %v1535 = vmax.f32 %v1534, %v1486
        %v1536 = vmax.f32 %v1535, %v1494
        %v1537 = vrot.slane %v1536, 4
        %v1538 = vmax.f32 %v1536, %v1537
        %v1539 = vrot.slane %v1538, 2
        %v1540 = vmax.f32 %v1538, %v1539
        %v1541 = vrot.slane %v1540, 1
        %v1542 = vmax.f32 %v1540, %v1541
        %v1543 = vmax.f32 %v1375, %v1383
        %v1544 = vmax.f32 %v1543, %v1391
        %v1545 = vmax.f32 %v1544, %v1399
        %v1546 = vmax.f32 %v1545, %v1407
        %v1547 = vmax.f32 %v1546, %v1415
        %v1548 = vmax.f32 %v1547, %v1423
        %v1549 = vmax.f32 %v1548, %v1431
        %v1550 = vmax.f32 %v1549, %v1439
        %v1551 = vmax.f32 %v1550, %v1447
        %v1552 = vmax.f32 %v1551, %v1455
        %v1553 = vmax.f32 %v1552, %v1463
        %v1554 = vmax.f32 %v1553, %v1471
        %v1555 = vmax.f32 %v1554, %v1479
        %v1556 = vmax.f32 %v1555, %v1487
        %v1557 = vmax.f32 %v1556, %v1495
        %v1558 = vrot.slane %v1557, 4
        %v1559 = vmax.f32 %v1557, %v1558
        %v1560 = vrot.slane %v1559, 2
        %v1561 = vmax.f32 %v1559, %v1560
        %v1562 = vrot.slane %v1561, 1
        %v1563 = vmax.f32 %v1561, %v1562
        %v1564 = vmax.f32 %v1376, %v1384
        %v1565 = vmax.f32 %v1564, %v1392
        %v1566 = vmax.f32 %v1565, %v1400
        %v1567 = vmax.f32 %v1566, %v1408
        %v1568 = vmax.f32 %v1567, %v1416
        %v1569 = vmax.f32 %v1568, %v1424
        %v1570 = vmax.f32 %v1569, %v1432
        %v1571 = vmax.f32 %v1570, %v1440
        %v1572 = vmax.f32 %v1571, %v1448
        %v1573 = vmax.f32 %v1572, %v1456
        %v1574 = vmax.f32 %v1573, %v1464
        %v1575 = vmax.f32 %v1574, %v1472
        %v1576 = vmax.f32 %v1575, %v1480
        %v1577 = vmax.f32 %v1576, %v1488
        %v1578 = vmax.f32 %v1577, %v1496
        %v1579 = vrot.slane %v1578, 4
        %v1580 = vmax.f32 %v1578, %v1579
        %v1581 = vrot.slane %v1580, 2
        %v1582 = vmax.f32 %v1580, %v1581
        %v1583 = vrot.slane %v1582, 1
        %v1584 = vmax.f32 %v1582, %v1583
        %v1585 = vmax.f32 %v1377, %v1385
        %v1586 = vmax.f32 %v1585, %v1393
        %v1587 = vmax.f32 %v1586, %v1401
        %v1588 = vmax.f32 %v1587, %v1409
        %v1589 = vmax.f32 %v1588, %v1417
        %v1590 = vmax.f32 %v1589, %v1425
        %v1591 = vmax.f32 %v1590, %v1433
        %v1592 = vmax.f32 %v1591, %v1441
        %v1593 = vmax.f32 %v1592, %v1449
        %v1594 = vmax.f32 %v1593, %v1457
        %v1595 = vmax.f32 %v1594, %v1465
        %v1596 = vmax.f32 %v1595, %v1473
        %v1597 = vmax.f32 %v1596, %v1481
        %v1598 = vmax.f32 %v1597, %v1489
        %v1599 = vmax.f32 %v1598, %v1497
        %v1600 = vrot.slane %v1599, 4
        %v1601 = vmax.f32 %v1599, %v1600
        %v1602 = vrot.slane %v1601, 2
        %v1603 = vmax.f32 %v1601, %v1602
        %v1604 = vrot.slane %v1603, 1
        %v1605 = vmax.f32 %v1603, %v1604
        %v1606 = vmax.f32 %v1378, %v1386
        %v1607 = vmax.f32 %v1606, %v1394
        %v1608 = vmax.f32 %v1607, %v1402
        %v1609 = vmax.f32 %v1608, %v1410
        %v1610 = vmax.f32 %v1609, %v1418
        %v1611 = vmax.f32 %v1610, %v1426
        %v1612 = vmax.f32 %v1611, %v1434
        %v1613 = vmax.f32 %v1612, %v1442
        %v1614 = vmax.f32 %v1613, %v1450
        %v1615 = vmax.f32 %v1614, %v1458
        %v1616 = vmax.f32 %v1615, %v1466
        %v1617 = vmax.f32 %v1616, %v1474
        %v1618 = vmax.f32 %v1617, %v1482
        %v1619 = vmax.f32 %v1618, %v1490
        %v1620 = vmax.f32 %v1619, %v1498
        %v1621 = vrot.slane %v1620, 4
        %v1622 = vmax.f32 %v1620, %v1621
        %v1623 = vrot.slane %v1622, 2
        %v1624 = vmax.f32 %v1622, %v1623
        %v1625 = vrot.slane %v1624, 1
        %v1626 = vmax.f32 %v1624, %v1625
        %v1627 = vmax.f32 %v1379, %v1387
        %v1628 = vmax.f32 %v1627, %v1395
        %v1629 = vmax.f32 %v1628, %v1403
        %v1630 = vmax.f32 %v1629, %v1411
        %v1631 = vmax.f32 %v1630, %v1419
        %v1632 = vmax.f32 %v1631, %v1427
        %v1633 = vmax.f32 %v1632, %v1435
        %v1634 = vmax.f32 %v1633, %v1443
        %v1635 = vmax.f32 %v1634, %v1451
        %v1636 = vmax.f32 %v1635, %v1459
        %v1637 = vmax.f32 %v1636, %v1467
        %v1638 = vmax.f32 %v1637, %v1475
        %v1639 = vmax.f32 %v1638, %v1483
        %v1640 = vmax.f32 %v1639, %v1491
        %v1641 = vmax.f32 %v1640, %v1499
        %v1642 = vrot.slane %v1641, 4
        %v1643 = vmax.f32 %v1641, %v1642
        %v1644 = vrot.slane %v1643, 2
        %v1645 = vmax.f32 %v1643, %v1644
        %v1646 = vrot.slane %v1645, 1
        %v1647 = vmax.f32 %v1645, %v1646
        %v1648 = vmax.f32 %v1380, %v1388
        %v1649 = vmax.f32 %v1648, %v1396
        %v1650 = vmax.f32 %v1649, %v1404
        %v1651 = vmax.f32 %v1650, %v1412
        %v1652 = vmax.f32 %v1651, %v1420
        %v1653 = vmax.f32 %v1652, %v1428
        %v1654 = vmax.f32 %v1653, %v1436
        %v1655 = vmax.f32 %v1654, %v1444
        %v1656 = vmax.f32 %v1655, %v1452
        %v1657 = vmax.f32 %v1656, %v1460
        %v1658 = vmax.f32 %v1657, %v1468
        %v1659 = vmax.f32 %v1658, %v1476
        %v1660 = vmax.f32 %v1659, %v1484
        %v1661 = vmax.f32 %v1660, %v1492
        %v1662 = vmax.f32 %v1661, %v1500
        %v1663 = vrot.slane %v1662, 4
        %v1664 = vmax.f32 %v1662, %v1663
        %v1665 = vrot.slane %v1664, 2
        %v1666 = vmax.f32 %v1664, %v1665
        %v1667 = vrot.slane %v1666, 1
        %v1668 = vmax.f32 %v1666, %v1667
        %v1669 = vld [vmem:[%s294] sm:$0xff]
        %v1678 = vrot.slane %v1542, 7
        %v1679 = vrot.slane %v1563, 6
        %v1680 = vrot.slane %v1584, 5
        %v1681 = vrot.slane %v1605, 4
        %v1682 = vrot.slane %v1626, 3
        %v1683 = vrot.slane %v1647, 2
        %v1684 = vrot.slane %v1668, 1
        %vm1685 = vcmask 1040384
        %v1686 = vsel %vm1685, %v1521, %v1678
        %vm1687 = vcmask 1042434
        %v1688 = vsel %vm1687, %v1679, %v1680
        %vm1689 = vcmask 1041408
        %v1690 = vsel %vm1689, %v1686, %v1688
        %vm1691 = vcmask 1044484
        %v1692 = vsel %vm1691, %v1681, %v1682
        %vm1693 = vcmask 1046534
        %v1694 = vsel %vm1693, %v1683, %v1684
        %vm1695 = vcmask 1045508
        %v1696 = vsel %vm1695, %v1692, %v1694
        %vm1697 = vcmask 1043456
        %v1698 = vsel %vm1697, %v1690, %v1696
        %v1700 = vmax.f32 %v1669, %v1698
        %1701 = vst [vmem:[%s294] sm:$0xff] %v1700
        %s1702 = sand.u32 %s195, 1
        %s1703 = scalar_lea.sflag [#allocation3], %s1702
        %s1704 = sand.u32 %s195, 1
        %s1705 = smul.addr %s1704, 8
        %s1706 = scalar_lea.vmem [#allocation2], %s1705
        // Predicated region
        $region53: #{tpu_custom_call.1} parent=47 // pred_check
          %p1707 = pneg %p205
        $region54: #{tpu_custom_call.1} parent=47 // pred_check_branch
          %1709 = sbr.rel (%p1707) target = $region56
        $region55: #{tpu_custom_call.1} parent=47 // pred_region
          %1711 = vsyncadd %s1703, 0
          %s1712 = smul.addr %s25, 8
          %s1713 = scalar_lea.hbm %s7, %s1712
          %s1715 = sshll.u32 %s1706, 4
          %s1716 = int_to_ptr.vmem [resolvable:$true] %s1715
          %s1717 = sshll.u32 %s1713, 4
          %s1718 = int_to_ptr.hbm [resolvable:$true] %s1717
          %1720 = dma.vmem_to_hbm [thread:$0]  %s1716, 128, %s1718, %s1703
        $region56: #{tpu_custom_call.1} parent=47 // pred_fallthru
          _
      $region48: #{tpu_custom_call.1} parent=5 // pred_fallthru
        _
      %p1721 = scmp.le.s32.totalorder 2, %s16
      // Predicated region
      $region57: #{tpu_custom_call.1} parent=5 // pred_check
        %p1722 = pneg %p1721
      $region58: #{tpu_custom_call.1} parent=5 // pred_check_branch
        %1724 = sbr.rel (%p1722) target = $region60
      $region59: #{tpu_custom_call.1} parent=5 // pred_region
        %s1725 = ssub.s32 %s16, 2
        // Predicated region
        $region61: #{tpu_custom_call.1} parent=59 // pred_check
          %p1726 = pneg %p211
        $region62: #{tpu_custom_call.1} parent=59 // pred_check_branch
          %1728 = sbr.rel (%p1726) target = $region64
        $region63: #{tpu_custom_call.1} parent=59 // pred_region
          %s1729 = sand.u32 %s196, 1
          %s1730 = scalar_lea.sflag [#allocation3], %s1729
          %s1731 = sand.u32 %s196, 1
          %s1732 = smul.addr %s1731, 8
          %s1733 = scalar_lea.vmem [#allocation2], %s1732
          %1735 = dma.done %s1730, 128
        $region64: #{tpu_custom_call.1} parent=59 // pred_fallthru
          _
      $region60: #{tpu_custom_call.1} parent=5 // pred_fallthru
        _
    $region6: #{tpu_custom_call.1} parent=1 // loop_footer
      %s20 = sadd.s32 1, %s16
    $region7: #{tpu_custom_call.1} parent=1 // loop_footer_branch
      %15 = sbr.rel target = $region3
    $region8: #{tpu_custom_call.1} parent=1 // loop_exit
      _
    %1736 = vsyncpa [#allocation3], 1
    %s1737 = scalar_lea.sflag [#allocation3], 1
    %1738 = vsyncpa %s1737, 1

</llo_original>
